<compile_context>
chip_gen: v6e
topology: v6e:2x2x1
jax: 0.10.0
libtpu: 0.0.40
codegen_flags: <defaults>
</compile_context>

<pallas_src>
import jax
import jax.numpy as jnp
from jax.experimental import pallas as pl
from jax.experimental.pallas import tpu as pltpu

LAYER_SIZES = [813, 512, 256, 32, 8]
F_PAD = 896          # 813 padded up to 7 * 128 (lane-aligned K for layer 1)
DEFAULT_TB = 1024    # batch rows per grid step


def actor_kernel(x_ref, w1, b1, w2, b2, w3, b3, w4, b4, o_ref):
    # Fused MLP: bf16 MXU matmuls with f32 accumulation, then stable softmax.
    h = x_ref[...]  # already bf16 from the wrapper
    h = jnp.maximum(
        jnp.dot(h, w1[...], preferred_element_type=jnp.float32) + b1[...], 0.0)
    h = jnp.maximum(
        jnp.dot(h.astype(jnp.bfloat16), w2[...],
                preferred_element_type=jnp.float32) + b2[...], 0.0)
    h = jnp.maximum(
        jnp.dot(h.astype(jnp.bfloat16), w3[...],
                preferred_element_type=jnp.float32) + b3[...], 0.0)
    logits = jnp.dot(h.astype(jnp.bfloat16), w4[...],
                     preferred_element_type=jnp.float32) + b4[...]

    # softmax(dim=1) == softmax over the last axis for a 2-D input
    m = jnp.max(logits, axis=-1, keepdims=True)
    e = jnp.exp(logits - m)
    # exact reciprocal keeps row sums within 1e-5 of 1.0
    o_ref[...] = e * pl.reciprocal(jnp.sum(e, axis=-1, keepdims=True),
                                   approx=False)


def _prepare_params(params):
    """Pad W1 input dim 813->896 with zero rows; weights -> bf16, biases f32."""
    prepped = []
    for i in range(0, len(params), 2):
        w, b = params[i], params[i + 1]
        if i == 0 and w.shape[0] != F_PAD:
            w = jnp.zeros((F_PAD, w.shape[1]), w.dtype).at[: w.shape[0], :].set(w)
        prepped.append(w.astype(jnp.bfloat16))
        prepped.append(b.astype(jnp.float32))
    return prepped


def actor_forward(x, params, tb=DEFAULT_TB):
    """x: (B, 813) float32 -> (B, 8) action probabilities (float32)."""
    B, F = x.shape
    n_out = LAYER_SIZES[-1]

    prepped = _prepare_params(params)

    # Batch tile: multiple of 8 sublanes, capped at `tb`; pad B to a multiple.
    TB = min(tb, max(8, ((B + 7) // 8) * 8))
    B_pad = ((B + TB - 1) // TB) * TB

    # Fused pad + cast: zero feature columns contribute nothing to the matmul,
    # zero batch rows are sliced off at the end.
    x_p = jnp.pad(x.astype(jnp.bfloat16), ((0, B_pad - B), (0, F_PAD - F)))

    def _tile_map(i):
        return (i, 0)

    def _const_map(i):
        return (0, 0)

    in_specs = [pl.BlockSpec((TB, F_PAD), _tile_map)]
    # Full-shape, constant-index specs keep weights/biases VMEM-resident.
    for p in prepped:
        in_specs.append(pl.BlockSpec(p.shape, _const_map))

    out = pl.pallas_call(
        actor_kernel,
        out_shape=jax.ShapeDtypeStruct((B_pad, n_out), jnp.float32),
        grid=(B_pad // TB,),
        in_specs=in_specs,
        out_specs=pl.BlockSpec((TB, n_out), _tile_map),
        compiler_params=pltpu.CompilerParams(
            dimension_semantics=("parallel",),       # megacore on v7x
            vmem_limit_bytes=48 * 1024 * 1024,       # headroom under v7x 64 MiB
        ),
    )(x_p, *prepped)

    return out[:B]


def init_params(key):
    """Deterministic init mimicking PyTorch's default U(-1/sqrt(fan_in), +)."""
    params = []
    for i in range(len(LAYER_SIZES) - 1):
        fan_in, fan_out = LAYER_SIZES[i], LAYER_SIZES[i + 1]
        key, kw, kb = jax.random.split(key, 3)
        bound = 1.0 / jnp.sqrt(jnp.float32(fan_in))
        # stored as (in, out): already transposed relative to torch's (out, in)
        w = jax.random.uniform(kw, (fan_in, fan_out), jnp.float32, -bound, bound)
        b = jax.random.uniform(kb, (1, fan_out), jnp.float32, -bound, bound)
        params += [w, b]
    return params


if __name__ == "__main__":
    key = jax.random.PRNGKey(0)
    key, kx, kx2 = jax.random.split(key, 3)
    params = init_params(key)

    # Small-shape check (single tile, padded batch).
    B = 2
    x = jax.random.normal(kx, (B, 813), dtype=jnp.float32)
    probs = jax.block_until_ready(actor_forward(x, params))
    assert probs.shape == (B, 8)
    row_sums = jnp.sum(probs, axis=1)
    assert bool(jnp.all(jnp.abs(row_sums - 1.0) < 1e-5))
    assert bool(jnp.all(probs >= 0.0))

    # Multi-tile grid check (exercises the pipelined batch grid).
    B2 = 4096
    x2 = jax.random.normal(kx2, (B2, 813), dtype=jnp.float32)
    probs2 = jax.block_until_ready(actor_forward(x2, params))
    assert probs2.shape == (B2, 8)
    row_sums2 = jnp.sum(probs2, axis=1)
    assert bool(jnp.all(jnp.abs(row_sums2 - 1.0) < 1e-5))

    print("KERNEL_OK")
</pallas_src>

<mosaic_0001>
module attributes {stable_mosaic.version = 11 : i64} {
  func.func @actor_kernel(%arg0: i32, %arg1: memref<8x896xbf16, #tpu.memory_space<vmem>>, %arg2: memref<896x512xbf16, #tpu.memory_space<vmem>>, %arg3: memref<1x512xf32, #tpu.memory_space<vmem>>, %arg4: memref<512x256xbf16, #tpu.memory_space<vmem>>, %arg5: memref<1x256xf32, #tpu.memory_space<vmem>>, %arg6: memref<256x32xbf16, #tpu.memory_space<vmem>>, %arg7: memref<1x32xf32, #tpu.memory_space<vmem>>, %arg8: memref<32x8xbf16, #tpu.memory_space<vmem>>, %arg9: memref<1x8xf32, #tpu.memory_space<vmem>>, %arg10: memref<8x8xf32, #tpu.memory_space<vmem>>) attributes {dimension_semantics = [#tpu.dimension_semantics<parallel>], iteration_bounds = array<i64: 1>, scalar_prefetch = 0 : i64, scratch_operands = 0 : i64, tpu.core_type = #tpu.core_type<tc>, window_params = [{transform_indices = @transform_0, window_bounds = array<i64: 8, 896>}, {pipeline_mode = #tpu.pipeline_mode<synchronous>, transform_indices = @transform_1, window_bounds = array<i64: 896, 512>}, {pipeline_mode = #tpu.pipeline_mode<synchronous>, transform_indices = @transform_2, window_bounds = array<i64: 1, 512>}, {pipeline_mode = #tpu.pipeline_mode<synchronous>, transform_indices = @transform_3, window_bounds = array<i64: 512, 256>}, {pipeline_mode = #tpu.pipeline_mode<synchronous>, transform_indices = @transform_4, window_bounds = array<i64: 1, 256>}, {pipeline_mode = #tpu.pipeline_mode<synchronous>, transform_indices = @transform_5, window_bounds = array<i64: 256, 32>}, {pipeline_mode = #tpu.pipeline_mode<synchronous>, transform_indices = @transform_6, window_bounds = array<i64: 1, 32>}, {pipeline_mode = #tpu.pipeline_mode<synchronous>, transform_indices = @transform_7, window_bounds = array<i64: 32, 8>}, {pipeline_mode = #tpu.pipeline_mode<synchronous>, transform_indices = @transform_8, window_bounds = array<i64: 1, 8>}, {transform_indices = @transform_9, window_bounds = array<i64: 8, 8>}]} {
    %c0 = arith.constant 0 : index
    %c0_0 = arith.constant 0 : index
    %0 = vector.load %arg1[%c0, %c0_0] : memref<8x896xbf16, #tpu.memory_space<vmem>>, vector<8x896xbf16>
    %c0_1 = arith.constant 0 : index
    %c0_2 = arith.constant 0 : index
    %1 = vector.load %arg2[%c0_1, %c0_2] : memref<896x512xbf16, #tpu.memory_space<vmem>>, vector<896x512xbf16>
    %cst = arith.constant dense<0.000000e+00> : vector<8x512xf32>
    %2 = tpu.matmul %0, %1, %cst {dimension_numbers = #tpu.dot_dimension_numbers<[1], [0], [0], [1], [0, 0, 1, 1], [], []>} : vector<8x896xbf16>, vector<896x512xbf16>, vector<8x512xf32> -> vector<8x512xf32>
    %c0_3 = arith.constant 0 : index
    %c0_4 = arith.constant 0 : index
    %3 = vector.load %arg3[%c0_3, %c0_4] : memref<1x512xf32, #tpu.memory_space<vmem>>, vector<1x512xf32>
    %4 = vector.broadcast %3 : vector<1x512xf32> to vector<8x512xf32>
    %5 = arith.addf %2, %4 : vector<8x512xf32>
    %cst_5 = arith.constant 0.000000e+00 : f32
    %6 = vector.broadcast %cst_5 : f32 to vector<8x512xf32>
    %7 = arith.maximumf %5, %6 : vector<8x512xf32>
    %8 = arith.truncf %7 : vector<8x512xf32> to vector<8x512xbf16>
    %c0_6 = arith.constant 0 : index
    %c0_7 = arith.constant 0 : index
    %9 = vector.load %arg4[%c0_6, %c0_7] : memref<512x256xbf16, #tpu.memory_space<vmem>>, vector<512x256xbf16>
    %cst_8 = arith.constant dense<0.000000e+00> : vector<8x256xf32>
    %10 = tpu.matmul %8, %9, %cst_8 {dimension_numbers = #tpu.dot_dimension_numbers<[1], [0], [0], [1], [0, 0, 1, 1], [], []>} : vector<8x512xbf16>, vector<512x256xbf16>, vector<8x256xf32> -> vector<8x256xf32>
    %c0_9 = arith.constant 0 : index
    %c0_10 = arith.constant 0 : index
    %11 = vector.load %arg5[%c0_9, %c0_10] : memref<1x256xf32, #tpu.memory_space<vmem>>, vector<1x256xf32>
    %12 = vector.broadcast %11 : vector<1x256xf32> to vector<8x256xf32>
    %13 = arith.addf %10, %12 : vector<8x256xf32>
    %cst_11 = arith.constant 0.000000e+00 : f32
    %14 = vector.broadcast %cst_11 : f32 to vector<8x256xf32>
    %15 = arith.maximumf %13, %14 : vector<8x256xf32>
    %16 = arith.truncf %15 : vector<8x256xf32> to vector<8x256xbf16>
    %c0_12 = arith.constant 0 : index
    %c0_13 = arith.constant 0 : index
    %17 = vector.load %arg6[%c0_12, %c0_13] : memref<256x32xbf16, #tpu.memory_space<vmem>>, vector<256x32xbf16>
    %cst_14 = arith.constant dense<0.000000e+00> : vector<8x32xf32>
    %18 = tpu.matmul %16, %17, %cst_14 {dimension_numbers = #tpu.dot_dimension_numbers<[1], [0], [0], [1], [0, 0, 1, 1], [], []>} : vector<8x256xbf16>, vector<256x32xbf16>, vector<8x32xf32> -> vector<8x32xf32>
    %c0_15 = arith.constant 0 : index
    %c0_16 = arith.constant 0 : index
    %19 = vector.load %arg7[%c0_15, %c0_16] : memref<1x32xf32, #tpu.memory_space<vmem>>, vector<1x32xf32>
    %20 = vector.broadcast %19 : vector<1x32xf32> to vector<8x32xf32>
    %21 = arith.addf %18, %20 : vector<8x32xf32>
    %cst_17 = arith.constant 0.000000e+00 : f32
    %22 = vector.broadcast %cst_17 : f32 to vector<8x32xf32>
    %23 = arith.maximumf %21, %22 : vector<8x32xf32>
    %24 = arith.truncf %23 : vector<8x32xf32> to vector<8x32xbf16>
    %c0_18 = arith.constant 0 : index
    %c0_19 = arith.constant 0 : index
    %25 = vector.load %arg8[%c0_18, %c0_19] : memref<32x8xbf16, #tpu.memory_space<vmem>>, vector<32x8xbf16>
    %cst_20 = arith.constant dense<0.000000e+00> : vector<8x8xf32>
    %26 = tpu.matmul %24, %25, %cst_20 {dimension_numbers = #tpu.dot_dimension_numbers<[1], [0], [0], [1], [0, 0, 1, 1], [], []>} : vector<8x32xbf16>, vector<32x8xbf16>, vector<8x8xf32> -> vector<8x8xf32>
    %c0_21 = arith.constant 0 : index
    %c0_22 = arith.constant 0 : index
    %27 = vector.load %arg9[%c0_21, %c0_22] : memref<1x8xf32, #tpu.memory_space<vmem>>, vector<1x8xf32>
    %28 = vector.broadcast %27 : vector<1x8xf32> to vector<8x8xf32>
    %29 = arith.addf %26, %28 : vector<8x8xf32>
    %cst_23 = arith.constant dense<0xFF800000> : vector<8xf32>
    %30 = vector.multi_reduction <maximumf>, %29, %cst_23 [1] : vector<8x8xf32> to vector<8xf32>
    %31 = vector.shape_cast %30 : vector<8xf32> to vector<8x1xf32>
    %32 = vector.broadcast %31 : vector<8x1xf32> to vector<8x8xf32>
    %33 = arith.subf %29, %32 : vector<8x8xf32>
    %34 = math.exp %33 : vector<8x8xf32>
    %cst_24 = arith.constant dense<0.000000e+00> : vector<8xf32>
    %35 = vector.multi_reduction <add>, %34, %cst_24 [1] : vector<8x8xf32> to vector<8xf32>
    %36 = vector.shape_cast %35 : vector<8xf32> to vector<8x1xf32>
    %37 = tpu.reciprocal %36 : vector<8x1xf32> -> vector<8x1xf32>
    %38 = vector.broadcast %37 : vector<8x1xf32> to vector<8x8xf32>
    %39 = arith.mulf %34, %38 : vector<8x8xf32>
    %c0_25 = arith.constant 0 : index
    %c0_26 = arith.constant 0 : index
    %40 = vector.load %arg10[%c0_25, %c0_26] : memref<8x8xf32, #tpu.memory_space<vmem>>, vector<8x8xf32>
    tpu.vector_store %arg10[%c0_25, %c0_26], %39 {strides = array<i32>} : memref<8x8xf32, #tpu.memory_space<vmem>>, vector<8x8xf32>,
    return
  }
  func.func @transform_0(%arg0: i32) -> (i32, i32) {
    %c0_i32 = arith.constant 0 : i32
    %c0_i32_0 = arith.constant 0 : i32
    return %arg0, %c0_i32 : i32, i32
  }
  func.func @transform_1(%arg0: i32) -> (i32, i32) {
    %c0_i32 = arith.constant 0 : i32
    %c0_i32_0 = arith.constant 0 : i32
    %c0_i32_1 = arith.constant 0 : i32
    return %c0_i32, %c0_i32_0 : i32, i32
  }
  func.func @transform_2(%arg0: i32) -> (i32, i32) {
    %c0_i32 = arith.constant 0 : i32
    %c0_i32_0 = arith.constant 0 : i32
    %c0_i32_1 = arith.constant 0 : i32
    return %c0_i32, %c0_i32_0 : i32, i32
  }
  func.func @transform_3(%arg0: i32) -> (i32, i32) {
    %c0_i32 = arith.constant 0 : i32
    %c0_i32_0 = arith.constant 0 : i32
    %c0_i32_1 = arith.constant 0 : i32
    return %c0_i32, %c0_i32_0 : i32, i32
  }
  func.func @transform_4(%arg0: i32) -> (i32, i32) {
    %c0_i32 = arith.constant 0 : i32
    %c0_i32_0 = arith.constant 0 : i32
    %c0_i32_1 = arith.constant 0 : i32
    return %c0_i32, %c0_i32_0 : i32, i32
  }
  func.func @transform_5(%arg0: i32) -> (i32, i32) {
    %c0_i32 = arith.constant 0 : i32
    %c0_i32_0 = arith.constant 0 : i32
    %c0_i32_1 = arith.constant 0 : i32
    return %c0_i32, %c0_i32_0 : i32, i32
  }
  func.func @transform_6(%arg0: i32) -> (i32, i32) {
    %c0_i32 = arith.constant 0 : i32
    %c0_i32_0 = arith.constant 0 : i32
    %c0_i32_1 = arith.constant 0 : i32
    return %c0_i32, %c0_i32_0 : i32, i32
  }
  func.func @transform_7(%arg0: i32) -> (i32, i32) {
    %c0_i32 = arith.constant 0 : i32
    %c0_i32_0 = arith.constant 0 : i32
    %c0_i32_1 = arith.constant 0 : i32
    return %c0_i32, %c0_i32_0 : i32, i32
  }
  func.func @transform_8(%arg0: i32) -> (i32, i32) {
    %c0_i32 = arith.constant 0 : i32
    %c0_i32_0 = arith.constant 0 : i32
    %c0_i32_1 = arith.constant 0 : i32
    return %c0_i32, %c0_i32_0 : i32, i32
  }
  func.func @transform_9(%arg0: i32) -> (i32, i32) {
    %c0_i32 = arith.constant 0 : i32
    %c0_i32_0 = arith.constant 0 : i32
    return %arg0, %c0_i32 : i32, i32
  }
}

</mosaic_0001>

<llo_original>
// kernel: tpu_custom_call.1
$region0: #{tpu_custom_call.1}
  #allocation0 [shape = 'u32[]', space=smem, size = 0x4, offset = 0x4, fixed_abs, tag = 'smem constant byte address 0x4 - core index']
  #allocation1 [shape = 'u32[144,128]{1,0:T(1,128)}', space=vmem, size = 0x12000, scoped, tag = 'internal scratch']
  %s0 = inlined_call_operand.vmem [shape: bf16[8,896], index: 0, kind: input, shape index: {}]
  %s1 = inlined_call_operand.hbm [shape: bf16[896,512], index: 1, kind: input, shape index: {}]
  %s2 = inlined_call_operand.vmem [shape: f32[1,512], index: 2, kind: input, shape index: {}]
  %s3 = inlined_call_operand.hbm [shape: bf16[512,256], index: 3, kind: input, shape index: {}]
  %s4 = inlined_call_operand.vmem [shape: f32[1,256], index: 4, kind: input, shape index: {}]
  %s5 = inlined_call_operand.vmem [shape: bf16[256,32], index: 5, kind: input, shape index: {}]
  %s6 = inlined_call_operand.vmem [shape: f32[1,32], index: 6, kind: input, shape index: {}]
  %s7 = inlined_call_operand.vmem [shape: bf16[32,8], index: 7, kind: input, shape index: {}]
  %s8 = inlined_call_operand.vmem [shape: f32[1,8], index: 8, kind: input, shape index: {}]
  %s9 = inlined_call_operand.hbm [shape: f32[8,8], index: 9, kind: output, shape index: {}]
  %s10 = sld [smem:[#allocation0]]
  $region54: #{tpu_custom_call.1} parent=0
    _
  %s12 = ssub.s32 1, %s10
  %s13 = scalar_select 0, %s12, %s10
  $region1: #{tpu_custom_call.1} parent=0
    #allocation2 [shape = 'u8[917504]{0}', space=vmem, size = 0xe0000, scoped, tag = 'input window, operand 1, single buffered']
    #allocation3 [shape = 's32[1]{0}', space=sflag, size = 0x4, scoped, tag = 'scoped memory for tpu_custom_call.1']
    #allocation4 [shape = 's32[1]{0}', space=sflag, size = 0x4, scoped, tag = 'scoped memory for tpu_custom_call.1']
    #allocation5 [shape = 'u8[262144]{0}', space=vmem, size = 0x40000, scoped, tag = 'input window, operand 3, single buffered']
    #allocation6 [shape = 's32[1]{0}', space=sflag, size = 0x4, scoped, tag = 'scoped memory for tpu_custom_call.1']
    #allocation7 [shape = 'u8[4096]{0}', space=vmem, size = 0x1000, scoped, tag = 'output window, operand 0, single buffered']
    %14 = vsyncpa [#allocation3], 0
    %15 = vsyncpa [#allocation6], 0
    %16 = vsyncpa [#allocation4], 0
    // Predicated region
    $region2: #{tpu_custom_call.1} parent=1 // pred_check
      _
    $region3: #{tpu_custom_call.1} parent=1 // pred_check_branch
      %18 = sbr.rel (0) target = $region5
    $region4: #{tpu_custom_call.1} parent=1 // pred_region
      _
    $region5: #{tpu_custom_call.1} parent=1 // pred_fallthru
      _
    // Predicated region
    $region6: #{tpu_custom_call.1} parent=1 // pred_check
      _
    $region7: #{tpu_custom_call.1} parent=1 // pred_check_branch
      %20 = sbr.rel (0) target = $region9
    $region8: #{tpu_custom_call.1} parent=1 // pred_region
      %s22 = ssub.s32 28672, 28672
      %23 = vsyncadd [#allocation3], %s22
      %s24 = sshll.u32 [#allocation2], 4
      %s25 = int_to_ptr.vmem [resolvable:$true] %s24
      %30 = dma.hbm_to_vmem [thread:$0]  %s1, 28672, %s25, [#allocation3], 256, 256, 16
    $region9: #{tpu_custom_call.1} parent=1 // pred_fallthru
      _
    // Predicated region
    $region10: #{tpu_custom_call.1} parent=1 // pred_check
      _
    $region11: #{tpu_custom_call.1} parent=1 // pred_check_branch
      %32 = sbr.rel (0) target = $region13
    $region12: #{tpu_custom_call.1} parent=1 // pred_region
      _
    $region13: #{tpu_custom_call.1} parent=1 // pred_fallthru
      _
    // Predicated region
    $region14: #{tpu_custom_call.1} parent=1 // pred_check
      _
    $region15: #{tpu_custom_call.1} parent=1 // pred_check_branch
      %34 = sbr.rel (0) target = $region17
    $region16: #{tpu_custom_call.1} parent=1 // pred_region
      %s36 = ssub.s32 8192, 8192
      %37 = vsyncadd [#allocation6], %s36
      %s38 = sshll.u32 [#allocation5], 4
      %s39 = int_to_ptr.vmem [resolvable:$true] %s38
      %44 = dma.hbm_to_vmem [thread:$0]  %s3, 8192, %s39, [#allocation6], 128, 128, 8
    $region17: #{tpu_custom_call.1} parent=1 // pred_fallthru
      _
    // Predicated region
    $region18: #{tpu_custom_call.1} parent=1 // pred_check
      _
    $region19: #{tpu_custom_call.1} parent=1 // pred_check_branch
      %46 = sbr.rel (0) target = $region21
    $region20: #{tpu_custom_call.1} parent=1 // pred_region
      _
    $region21: #{tpu_custom_call.1} parent=1 // pred_fallthru
      _
    // Predicated region
    $region22: #{tpu_custom_call.1} parent=1 // pred_check
      _
    $region23: #{tpu_custom_call.1} parent=1 // pred_check_branch
      %48 = sbr.rel (0) target = $region25
    $region24: #{tpu_custom_call.1} parent=1 // pred_region
      _
    $region25: #{tpu_custom_call.1} parent=1 // pred_fallthru
      _
    // Predicated region
    $region26: #{tpu_custom_call.1} parent=1 // pred_check
      _
    $region27: #{tpu_custom_call.1} parent=1 // pred_check_branch
      %50 = sbr.rel (0) target = $region29
    $region28: #{tpu_custom_call.1} parent=1 // pred_region
      _
    $region29: #{tpu_custom_call.1} parent=1 // pred_fallthru
      _
    // Predicated region
    $region30: #{tpu_custom_call.1} parent=1 // pred_check
      _
    $region31: #{tpu_custom_call.1} parent=1 // pred_check_branch
      %52 = sbr.rel (0) target = $region33
    $region32: #{tpu_custom_call.1} parent=1 // pred_region
      _
    $region33: #{tpu_custom_call.1} parent=1 // pred_fallthru
      _
    // Predicated region
    $region34: #{tpu_custom_call.1} parent=1 // pred_check
      _
    $region35: #{tpu_custom_call.1} parent=1 // pred_check_branch
      %54 = sbr.rel (0) target = $region37
    $region36: #{tpu_custom_call.1} parent=1 // pred_region
      _
    $region37: #{tpu_custom_call.1} parent=1 // pred_fallthru
      _
    // Predicated region
    $region38: #{tpu_custom_call.1} parent=1 // pred_check
      _
    $region39: #{tpu_custom_call.1} parent=1 // pred_check_branch
      %56 = sbr.rel (0) target = $region41
    $region40: #{tpu_custom_call.1} parent=1 // pred_region
      %57 = dma.done [#allocation3], 28672
    $region41: #{tpu_custom_call.1} parent=1 // pred_fallthru
      _
    // Predicated region
    $region42: #{tpu_custom_call.1} parent=1 // pred_check
      _
    $region43: #{tpu_custom_call.1} parent=1 // pred_check_branch
      %59 = sbr.rel (0) target = $region45
    $region44: #{tpu_custom_call.1} parent=1 // pred_region
      %60 = dma.done [#allocation6], 8192
    $region45: #{tpu_custom_call.1} parent=1 // pred_fallthru
      _
    %v62 = vld [vmem:[%s0] sm:$0xff]
    %v63 = vld [vmem:[%s0 + $0x8] sm:$0xff]
    %v64 = vld [vmem:[%s0 + $0x10] sm:$0xff]
    %v65 = vld [vmem:[%s0 + $0x18] sm:$0xf]
    %v66 = vld [vmem:[#allocation2] sm:$0xff]
    %v67 = vld [vmem:[#allocation2 + $0x8] sm:$0xff]
    %v68 = vld [vmem:[#allocation2 + $0x10] sm:$0xff]
    %v69 = vld [vmem:[#allocation2 + $0x18] sm:$0xff]
    %v70 = vld [vmem:[#allocation2 + $0x20] sm:$0xff]
    %v71 = vld [vmem:[#allocation2 + $0x28] sm:$0xff]
    %v72 = vld [vmem:[#allocation2 + $0x30] sm:$0xff]
    %v73 = vld [vmem:[#allocation2 + $0x38] sm:$0xff]
    %v74 = vld [vmem:[#allocation2 + $0x40] sm:$0xff]
    %v75 = vld [vmem:[#allocation2 + $0x48] sm:$0xff]
    %v76 = vld [vmem:[#allocation2 + $0x50] sm:$0xff]
    %v77 = vld [vmem:[#allocation2 + $0x58] sm:$0xff]
    %v78 = vld [vmem:[#allocation2 + $0x60] sm:$0xff]
    %v79 = vld [vmem:[#allocation2 + $0x68] sm:$0xff]
    %v80 = vld [vmem:[#allocation2 + $0x70] sm:$0xff]
    %v81 = vld [vmem:[#allocation2 + $0x78] sm:$0xff]
    %v82 = vld [vmem:[#allocation2 + $0x80] sm:$0xff]
    %v83 = vld [vmem:[#allocation2 + $0x88] sm:$0xff]
    %v84 = vld [vmem:[#allocation2 + $0x90] sm:$0xff]
    %v85 = vld [vmem:[#allocation2 + $0x98] sm:$0xff]
    %v86 = vld [vmem:[#allocation2 + $0xa0] sm:$0xff]
    %v87 = vld [vmem:[#allocation2 + $0xa8] sm:$0xff]
    %v88 = vld [vmem:[#allocation2 + $0xb0] sm:$0xff]
    %v89 = vld [vmem:[#allocation2 + $0xb8] sm:$0xff]
    %v90 = vld [vmem:[#allocation2 + $0xc0] sm:$0xff]
    %v91 = vld [vmem:[#allocation2 + $0xc8] sm:$0xff]
    %v92 = vld [vmem:[#allocation2 + $0xd0] sm:$0xff]
    %v93 = vld [vmem:[#allocation2 + $0xd8] sm:$0xff]
    %v94 = vld [vmem:[#allocation2 + $0xe0] sm:$0xff]
    %v95 = vld [vmem:[#allocation2 + $0xe8] sm:$0xff]
    %v96 = vld [vmem:[#allocation2 + $0xf0] sm:$0xff]
    %v97 = vld [vmem:[#allocation2 + $0xf8] sm:$0xff]
    %v98 = vld [vmem:[#allocation2 + $0x100] sm:$0xff]
    %v99 = vld [vmem:[#allocation2 + $0x108] sm:$0xff]
    %v100 = vld [vmem:[#allocation2 + $0x110] sm:$0xff]
    %v101 = vld [vmem:[#allocation2 + $0x118] sm:$0xff]
    %v102 = vld [vmem:[#allocation2 + $0x120] sm:$0xff]
    %v103 = vld [vmem:[#allocation2 + $0x128] sm:$0xff]
    %v104 = vld [vmem:[#allocation2 + $0x130] sm:$0xff]
    %v105 = vld [vmem:[#allocation2 + $0x138] sm:$0xff]
    %v106 = vld [vmem:[#allocation2 + $0x140] sm:$0xff]
    %v107 = vld [vmem:[#allocation2 + $0x148] sm:$0xff]
    %v108 = vld [vmem:[#allocation2 + $0x150] sm:$0xff]
    %v109 = vld [vmem:[#allocation2 + $0x158] sm:$0xff]
    %v110 = vld [vmem:[#allocation2 + $0x160] sm:$0xff]
    %v111 = vld [vmem:[#allocation2 + $0x168] sm:$0xff]
    %v112 = vld [vmem:[#allocation2 + $0x170] sm:$0xff]
    %v113 = vld [vmem:[#allocation2 + $0x178] sm:$0xff]
    %v114 = vld [vmem:[#allocation2 + $0x180] sm:$0xff]
    %v115 = vld [vmem:[#allocation2 + $0x188] sm:$0xff]
    %v116 = vld [vmem:[#allocation2 + $0x190] sm:$0xff]
    %v117 = vld [vmem:[#allocation2 + $0x198] sm:$0xff]
    %v118 = vld [vmem:[#allocation2 + $0x1a0] sm:$0xff]
    %v119 = vld [vmem:[#allocation2 + $0x1a8] sm:$0xff]
    %v120 = vld [vmem:[#allocation2 + $0x1b0] sm:$0xff]
    %v121 = vld [vmem:[#allocation2 + $0x1b8] sm:$0xff]
    %v122 = vld [vmem:[#allocation2 + $0x1c0] sm:$0xff]
    %v123 = vld [vmem:[#allocation2 + $0x1c8] sm:$0xff]
    %v124 = vld [vmem:[#allocation2 + $0x1d0] sm:$0xff]
    %v125 = vld [vmem:[#allocation2 + $0x1d8] sm:$0xff]
    %v126 = vld [vmem:[#allocation2 + $0x1e0] sm:$0xff]
    %v127 = vld [vmem:[#allocation2 + $0x1e8] sm:$0xff]
    %v128 = vld [vmem:[#allocation2 + $0x1f0] sm:$0xff]
    %v129 = vld [vmem:[#allocation2 + $0x1f8] sm:$0xff]
    %v130 = vld [vmem:[#allocation2 + $0x200] sm:$0xff]
    %v131 = vld [vmem:[#allocation2 + $0x208] sm:$0xff]
    %v132 = vld [vmem:[#allocation2 + $0x210] sm:$0xff]
    %v133 = vld [vmem:[#allocation2 + $0x218] sm:$0xff]
    %v134 = vld [vmem:[#allocation2 + $0x220] sm:$0xff]
    %v135 = vld [vmem:[#allocation2 + $0x228] sm:$0xff]
    %v136 = vld [vmem:[#allocation2 + $0x230] sm:$0xff]
    %v137 = vld [vmem:[#allocation2 + $0x238] sm:$0xff]
    %v138 = vld [vmem:[#allocation2 + $0x240] sm:$0xff]
    %v139 = vld [vmem:[#allocation2 + $0x248] sm:$0xff]
    %v140 = vld [vmem:[#allocation2 + $0x250] sm:$0xff]
    %v141 = vld [vmem:[#allocation2 + $0x258] sm:$0xff]
    %v142 = vld [vmem:[#allocation2 + $0x260] sm:$0xff]
    %v143 = vld [vmem:[#allocation2 + $0x268] sm:$0xff]
    %v144 = vld [vmem:[#allocation2 + $0x270] sm:$0xff]
    %v145 = vld [vmem:[#allocation2 + $0x278] sm:$0xff]
    %v146 = vld [vmem:[#allocation2 + $0x280] sm:$0xff]
    %v147 = vld [vmem:[#allocation2 + $0x288] sm:$0xff]
    %v148 = vld [vmem:[#allocation2 + $0x290] sm:$0xff]
    %v149 = vld [vmem:[#allocation2 + $0x298] sm:$0xff]
    %v150 = vld [vmem:[#allocation2 + $0x2a0] sm:$0xff]
    %v151 = vld [vmem:[#allocation2 + $0x2a8] sm:$0xff]
    %v152 = vld [vmem:[#allocation2 + $0x2b0] sm:$0xff]
    %v153 = vld [vmem:[#allocation2 + $0x2b8] sm:$0xff]
    %v154 = vld [vmem:[#allocation2 + $0x2c0] sm:$0xff]
    %v155 = vld [vmem:[#allocation2 + $0x2c8] sm:$0xff]
    %v156 = vld [vmem:[#allocation2 + $0x2d0] sm:$0xff]
    %v157 = vld [vmem:[#allocation2 + $0x2d8] sm:$0xff]
    %v158 = vld [vmem:[#allocation2 + $0x2e0] sm:$0xff]
    %v159 = vld [vmem:[#allocation2 + $0x2e8] sm:$0xff]
    %v160 = vld [vmem:[#allocation2 + $0x2f0] sm:$0xff]
    %v161 = vld [vmem:[#allocation2 + $0x2f8] sm:$0xff]
    %v162 = vld [vmem:[#allocation2 + $0x300] sm:$0xff]
    %v163 = vld [vmem:[#allocation2 + $0x308] sm:$0xff]
    %v164 = vld [vmem:[#allocation2 + $0x310] sm:$0xff]
    %v165 = vld [vmem:[#allocation2 + $0x318] sm:$0xff]
    %v166 = vld [vmem:[#allocation2 + $0x320] sm:$0xff]
    %v167 = vld [vmem:[#allocation2 + $0x328] sm:$0xff]
    %v168 = vld [vmem:[#allocation2 + $0x330] sm:$0xff]
    %v169 = vld [vmem:[#allocation2 + $0x338] sm:$0xff]
    %v170 = vld [vmem:[#allocation2 + $0x340] sm:$0xff]
    %v171 = vld [vmem:[#allocation2 + $0x348] sm:$0xff]
    %v172 = vld [vmem:[#allocation2 + $0x350] sm:$0xff]
    %v173 = vld [vmem:[#allocation2 + $0x358] sm:$0xff]
    %v174 = vld [vmem:[#allocation2 + $0x360] sm:$0xff]
    %v175 = vld [vmem:[#allocation2 + $0x368] sm:$0xff]
    %v176 = vld [vmem:[#allocation2 + $0x370] sm:$0xff]
    %v177 = vld [vmem:[#allocation2 + $0x378] sm:$0xff]
    %v178 = vld [vmem:[#allocation2 + $0x380] sm:$0xff]
    %v179 = vld [vmem:[#allocation2 + $0x388] sm:$0xff]
    %v180 = vld [vmem:[#allocation2 + $0x390] sm:$0xff]
    %v181 = vld [vmem:[#allocation2 + $0x398] sm:$0xff]
    %v182 = vld [vmem:[#allocation2 + $0x3a0] sm:$0xff]
    %v183 = vld [vmem:[#allocation2 + $0x3a8] sm:$0xff]
    %v184 = vld [vmem:[#allocation2 + $0x3b0] sm:$0xff]
    %v185 = vld [vmem:[#allocation2 + $0x3b8] sm:$0xff]
    %v186 = vld [vmem:[#allocation2 + $0x3c0] sm:$0xff]
    %v187 = vld [vmem:[#allocation2 + $0x3c8] sm:$0xff]
    %v188 = vld [vmem:[#allocation2 + $0x3d0] sm:$0xff]
    %v189 = vld [vmem:[#allocation2 + $0x3d8] sm:$0xff]
    %v190 = vld [vmem:[#allocation2 + $0x3e0] sm:$0xff]
    %v191 = vld [vmem:[#allocation2 + $0x3e8] sm:$0xff]
    %v192 = vld [vmem:[#allocation2 + $0x3f0] sm:$0xff]
    %v193 = vld [vmem:[#allocation2 + $0x3f8] sm:$0xff]
    %v194 = vld [vmem:[#allocation2 + $0x400] sm:$0xff]
    %v195 = vld [vmem:[#allocation2 + $0x408] sm:$0xff]
    %v196 = vld [vmem:[#allocation2 + $0x410] sm:$0xff]
    %v197 = vld [vmem:[#allocation2 + $0x418] sm:$0xff]
    %v198 = vld [vmem:[#allocation2 + $0x420] sm:$0xff]
    %v199 = vld [vmem:[#allocation2 + $0x428] sm:$0xff]
    %v200 = vld [vmem:[#allocation2 + $0x430] sm:$0xff]
    %v201 = vld [vmem:[#allocation2 + $0x438] sm:$0xff]
    %v202 = vld [vmem:[#allocation2 + $0x440] sm:$0xff]
    %v203 = vld [vmem:[#allocation2 + $0x448] sm:$0xff]
    %v204 = vld [vmem:[#allocation2 + $0x450] sm:$0xff]
    %v205 = vld [vmem:[#allocation2 + $0x458] sm:$0xff]
    %v206 = vld [vmem:[#allocation2 + $0x460] sm:$0xff]
    %v207 = vld [vmem:[#allocation2 + $0x468] sm:$0xff]
    %v208 = vld [vmem:[#allocation2 + $0x470] sm:$0xff]
    %v209 = vld [vmem:[#allocation2 + $0x478] sm:$0xff]
    %v210 = vld [vmem:[#allocation2 + $0x480] sm:$0xff]
    %v211 = vld [vmem:[#allocation2 + $0x488] sm:$0xff]
    %v212 = vld [vmem:[#allocation2 + $0x490] sm:$0xff]
    %v213 = vld [vmem:[#allocation2 + $0x498] sm:$0xff]
    %v214 = vld [vmem:[#allocation2 + $0x4a0] sm:$0xff]
    %v215 = vld [vmem:[#allocation2 + $0x4a8] sm:$0xff]
    %v216 = vld [vmem:[#allocation2 + $0x4b0] sm:$0xff]
    %v217 = vld [vmem:[#allocation2 + $0x4b8] sm:$0xff]
    %v218 = vld [vmem:[#allocation2 + $0x4c0] sm:$0xff]
    %v219 = vld [vmem:[#allocation2 + $0x4c8] sm:$0xff]
    %v220 = vld [vmem:[#allocation2 + $0x4d0] sm:$0xff]
    %v221 = vld [vmem:[#allocation2 + $0x4d8] sm:$0xff]
    %v222 = vld [vmem:[#allocation2 + $0x4e0] sm:$0xff]
    %v223 = vld [vmem:[#allocation2 + $0x4e8] sm:$0xff]
    %v224 = vld [vmem:[#allocation2 + $0x4f0] sm:$0xff]
    %v225 = vld [vmem:[#allocation2 + $0x4f8] sm:$0xff]
    %v226 = vld [vmem:[#allocation2 + $0x500] sm:$0xff]
    %v227 = vld [vmem:[#allocation2 + $0x508] sm:$0xff]
    %v228 = vld [vmem:[#allocation2 + $0x510] sm:$0xff]
    %v229 = vld [vmem:[#allocation2 + $0x518] sm:$0xff]
    %v230 = vld [vmem:[#allocation2 + $0x520] sm:$0xff]
    %v231 = vld [vmem:[#allocation2 + $0x528] sm:$0xff]
    %v232 = vld [vmem:[#allocation2 + $0x530] sm:$0xff]
    %v233 = vld [vmem:[#allocation2 + $0x538] sm:$0xff]
    %v234 = vld [vmem:[#allocation2 + $0x540] sm:$0xff]
    %v235 = vld [vmem:[#allocation2 + $0x548] sm:$0xff]
    %v236 = vld [vmem:[#allocation2 + $0x550] sm:$0xff]
    %v237 = vld [vmem:[#allocation2 + $0x558] sm:$0xff]
    %v238 = vld [vmem:[#allocation2 + $0x560] sm:$0xff]
    %v239 = vld [vmem:[#allocation2 + $0x568] sm:$0xff]
    %v240 = vld [vmem:[#allocation2 + $0x570] sm:$0xff]
    %v241 = vld [vmem:[#allocation2 + $0x578] sm:$0xff]
    %v242 = vld [vmem:[#allocation2 + $0x580] sm:$0xff]
    %v243 = vld [vmem:[#allocation2 + $0x588] sm:$0xff]
    %v244 = vld [vmem:[#allocation2 + $0x590] sm:$0xff]
    %v245 = vld [vmem:[#allocation2 + $0x598] sm:$0xff]
    %v246 = vld [vmem:[#allocation2 + $0x5a0] sm:$0xff]
    %v247 = vld [vmem:[#allocation2 + $0x5a8] sm:$0xff]
    %v248 = vld [vmem:[#allocation2 + $0x5b0] sm:$0xff]
    %v249 = vld [vmem:[#allocation2 + $0x5b8] sm:$0xff]
    %v250 = vld [vmem:[#allocation2 + $0x5c0] sm:$0xff]
    %v251 = vld [vmem:[#allocation2 + $0x5c8] sm:$0xff]
    %v252 = vld [vmem:[#allocation2 + $0x5d0] sm:$0xff]
    %v253 = vld [vmem:[#allocation2 + $0x5d8] sm:$0xff]
    %v254 = vld [vmem:[#allocation2 + $0x5e0] sm:$0xff]
    %v255 = vld [vmem:[#allocation2 + $0x5e8] sm:$0xff]
    %v256 = vld [vmem:[#allocation2 + $0x5f0] sm:$0xff]
    %v257 = vld [vmem:[#allocation2 + $0x5f8] sm:$0xff]
    %v258 = vld [vmem:[#allocation2 + $0x600] sm:$0xff]
    %v259 = vld [vmem:[#allocation2 + $0x608] sm:$0xff]
    %v260 = vld [vmem:[#allocation2 + $0x610] sm:$0xff]
    %v261 = vld [vmem:[#allocation2 + $0x618] sm:$0xff]
    %v262 = vld [vmem:[#allocation2 + $0x620] sm:$0xff]
    %v263 = vld [vmem:[#allocation2 + $0x628] sm:$0xff]
    %v264 = vld [vmem:[#allocation2 + $0x630] sm:$0xff]
    %v265 = vld [vmem:[#allocation2 + $0x638] sm:$0xff]
    %v266 = vld [vmem:[#allocation2 + $0x640] sm:$0xff]
    %v267 = vld [vmem:[#allocation2 + $0x648] sm:$0xff]
    %v268 = vld [vmem:[#allocation2 + $0x650] sm:$0xff]
    %v269 = vld [vmem:[#allocation2 + $0x658] sm:$0xff]
    %v270 = vld [vmem:[#allocation2 + $0x660] sm:$0xff]
    %v271 = vld [vmem:[#allocation2 + $0x668] sm:$0xff]
    %v272 = vld [vmem:[#allocation2 + $0x670] sm:$0xff]
    %v273 = vld [vmem:[#allocation2 + $0x678] sm:$0xff]
    %v274 = vld [vmem:[#allocation2 + $0x680] sm:$0xff]
    %v275 = vld [vmem:[#allocation2 + $0x688] sm:$0xff]
    %v276 = vld [vmem:[#allocation2 + $0x690] sm:$0xff]
    %v277 = vld [vmem:[#allocation2 + $0x698] sm:$0xff]
    %v278 = vld [vmem:[#allocation2 + $0x6a0] sm:$0xff]
    %v279 = vld [vmem:[#allocation2 + $0x6a8] sm:$0xff]
    %v280 = vld [vmem:[#allocation2 + $0x6b0] sm:$0xff]
    %v281 = vld [vmem:[#allocation2 + $0x6b8] sm:$0xff]
    %v282 = vld [vmem:[#allocation2 + $0x6c0] sm:$0xff]
    %v283 = vld [vmem:[#allocation2 + $0x6c8] sm:$0xff]
    %v284 = vld [vmem:[#allocation2 + $0x6d0] sm:$0xff]
    %v285 = vld [vmem:[#allocation2 + $0x6d8] sm:$0xff]
    %v286 = vld [vmem:[#allocation2 + $0x6e0] sm:$0xff]
    %v287 = vld [vmem:[#allocation2 + $0x6e8] sm:$0xff]
    %v288 = vld [vmem:[#allocation2 + $0x6f0] sm:$0xff]
    %v289 = vld [vmem:[#allocation2 + $0x6f8] sm:$0xff]
    %v290 = vld [vmem:[%s2] sm:$0xf]
    %v292 = vlaneseq
    %v293 = vshrl.u32 %v292, 7
    %v294 = vsub.s32 0, %v293
    %v295 = vrot.slane %v290, %v294
    %v296 = vlaneseq
    %v297 = vshrl.u32 %v296, 7
    %v298 = vsub.s32 1, %v297
    %v299 = vrot.slane %v290, %v298
    %v300 = vlaneseq
    %v301 = vshrl.u32 %v300, 7
    %v302 = vsub.s32 2, %v301
    %v303 = vrot.slane %v290, %v302
    %v304 = vlaneseq
    %v305 = vshrl.u32 %v304, 7
    %v306 = vsub.s32 3, %v305
    %v307 = vrot.slane %v290, %v306
    %v316 = vunpack.c.l.b16 %v62
    %v317 = vunpack.c.h.b16 %v62
    %v318 = vunpack.c.l.b16 %v63
    %v319 = vunpack.c.h.b16 %v63
    %v320 = vunpack.c.l.b16 %v64
    %v321 = vunpack.c.h.b16 %v64
    %v322 = vunpack.c.l.b16 %v65
    %v323 = vpack.c.b16 %v316, %v316
    %v324 = vpack.c.b16 %v317, %v317
    %v325 = vpack.c.b16 %v318, %v318
    %v326 = vpack.c.b16 %v319, %v319
    %v327 = vpack.c.b16 %v320, %v320
    %v328 = vpack.c.b16 %v321, %v321
    %v329 = vpack.c.b16 %v322, %v322
    %v561 = vunpack.c.l.b16 %v66
    %v562 = vunpack.c.h.b16 %v66
    %v563 = vunpack.c.l.b16 %v67
    %v564 = vunpack.c.h.b16 %v67
    %v565 = vunpack.c.l.b16 %v68
    %v566 = vunpack.c.h.b16 %v68
    %v567 = vunpack.c.l.b16 %v69
    %v568 = vunpack.c.h.b16 %v69
    %v569 = vunpack.c.l.b16 %v70
    %v570 = vunpack.c.h.b16 %v70
    %v571 = vunpack.c.l.b16 %v71
    %v572 = vunpack.c.h.b16 %v71
    %v573 = vunpack.c.l.b16 %v72
    %v574 = vunpack.c.h.b16 %v72
    %v575 = vunpack.c.l.b16 %v73
    %v576 = vunpack.c.h.b16 %v73
    %v577 = vunpack.c.l.b16 %v74
    %v578 = vunpack.c.h.b16 %v74
    %v579 = vunpack.c.l.b16 %v75
    %v580 = vunpack.c.h.b16 %v75
    %v581 = vunpack.c.l.b16 %v76
    %v582 = vunpack.c.h.b16 %v76
    %v583 = vunpack.c.l.b16 %v77
    %v584 = vunpack.c.h.b16 %v77
    %v585 = vunpack.c.l.b16 %v78
    %v586 = vunpack.c.h.b16 %v78
    %v587 = vunpack.c.l.b16 %v79
    %v588 = vunpack.c.h.b16 %v79
    %v589 = vunpack.c.l.b16 %v80
    %v590 = vunpack.c.h.b16 %v80
    %v591 = vunpack.c.l.b16 %v81
    %v592 = vunpack.c.h.b16 %v81
    %v593 = vunpack.c.l.b16 %v82
    %v594 = vunpack.c.h.b16 %v82
    %v595 = vunpack.c.l.b16 %v83
    %v596 = vunpack.c.h.b16 %v83
    %v597 = vunpack.c.l.b16 %v84
    %v598 = vunpack.c.h.b16 %v84
    %v599 = vunpack.c.l.b16 %v85
    %v600 = vunpack.c.h.b16 %v85
    %v601 = vunpack.c.l.b16 %v86
    %v602 = vunpack.c.h.b16 %v86
    %v603 = vunpack.c.l.b16 %v87
    %v604 = vunpack.c.h.b16 %v87
    %v605 = vunpack.c.l.b16 %v88
    %v606 = vunpack.c.h.b16 %v88
    %v607 = vunpack.c.l.b16 %v89
    %v608 = vunpack.c.h.b16 %v89
    %v609 = vunpack.c.l.b16 %v90
    %v610 = vunpack.c.h.b16 %v90
    %v611 = vunpack.c.l.b16 %v91
    %v612 = vunpack.c.h.b16 %v91
    %v613 = vunpack.c.l.b16 %v92
    %v614 = vunpack.c.h.b16 %v92
    %v615 = vunpack.c.l.b16 %v93
    %v616 = vunpack.c.h.b16 %v93
    %v617 = vunpack.c.l.b16 %v94
    %v618 = vunpack.c.h.b16 %v94
    %v619 = vunpack.c.l.b16 %v95
    %v620 = vunpack.c.h.b16 %v95
    %v621 = vunpack.c.l.b16 %v96
    %v622 = vunpack.c.h.b16 %v96
    %v623 = vunpack.c.l.b16 %v97
    %v624 = vunpack.c.h.b16 %v97
    %v625 = vunpack.c.l.b16 %v98
    %v626 = vunpack.c.h.b16 %v98
    %v627 = vunpack.c.l.b16 %v99
    %v628 = vunpack.c.h.b16 %v99
    %v629 = vunpack.c.l.b16 %v100
    %v630 = vunpack.c.h.b16 %v100
    %v631 = vunpack.c.l.b16 %v101
    %v632 = vunpack.c.h.b16 %v101
    %v633 = vunpack.c.l.b16 %v102
    %v634 = vunpack.c.h.b16 %v102
    %v635 = vunpack.c.l.b16 %v103
    %v636 = vunpack.c.h.b16 %v103
    %v637 = vunpack.c.l.b16 %v104
    %v638 = vunpack.c.h.b16 %v104
    %v639 = vunpack.c.l.b16 %v105
    %v640 = vunpack.c.h.b16 %v105
    %v641 = vunpack.c.l.b16 %v106
    %v642 = vunpack.c.h.b16 %v106
    %v643 = vunpack.c.l.b16 %v107
    %v644 = vunpack.c.h.b16 %v107
    %v645 = vunpack.c.l.b16 %v108
    %v646 = vunpack.c.h.b16 %v108
    %v647 = vunpack.c.l.b16 %v109
    %v648 = vunpack.c.h.b16 %v109
    %v649 = vunpack.c.l.b16 %v110
    %v650 = vunpack.c.h.b16 %v110
    %v651 = vunpack.c.l.b16 %v111
    %v652 = vunpack.c.h.b16 %v111
    %v653 = vunpack.c.l.b16 %v112
    %v654 = vunpack.c.h.b16 %v112
    %v655 = vunpack.c.l.b16 %v113
    %v656 = vunpack.c.h.b16 %v113
    %v657 = vunpack.c.l.b16 %v114
    %v658 = vunpack.c.h.b16 %v114
    %v659 = vunpack.c.l.b16 %v115
    %v660 = vunpack.c.h.b16 %v115
    %v661 = vunpack.c.l.b16 %v116
    %v662 = vunpack.c.h.b16 %v116
    %v663 = vunpack.c.l.b16 %v117
    %v664 = vunpack.c.h.b16 %v117
    %v665 = vunpack.c.l.b16 %v118
    %v666 = vunpack.c.h.b16 %v118
    %v667 = vunpack.c.l.b16 %v119
    %v668 = vunpack.c.h.b16 %v119
    %v669 = vunpack.c.l.b16 %v120
    %v670 = vunpack.c.h.b16 %v120
    %v671 = vunpack.c.l.b16 %v121
    %v672 = vunpack.c.h.b16 %v121
    %v673 = vunpack.c.l.b16 %v122
    %v674 = vunpack.c.h.b16 %v122
    %v675 = vunpack.c.l.b16 %v123
    %v676 = vunpack.c.h.b16 %v123
    %v677 = vunpack.c.l.b16 %v124
    %v678 = vunpack.c.h.b16 %v124
    %v679 = vunpack.c.l.b16 %v125
    %v680 = vunpack.c.h.b16 %v125
    %v681 = vunpack.c.l.b16 %v126
    %v682 = vunpack.c.h.b16 %v126
    %v683 = vunpack.c.l.b16 %v127
    %v684 = vunpack.c.h.b16 %v127
    %v685 = vunpack.c.l.b16 %v128
    %v686 = vunpack.c.h.b16 %v128
    %v687 = vunpack.c.l.b16 %v129
    %v688 = vunpack.c.h.b16 %v129
    %v689 = vunpack.c.l.b16 %v130
    %v690 = vunpack.c.h.b16 %v130
    %v691 = vunpack.c.l.b16 %v131
    %v692 = vunpack.c.h.b16 %v131
    %v693 = vunpack.c.l.b16 %v132
    %v694 = vunpack.c.h.b16 %v132
    %v695 = vunpack.c.l.b16 %v133
    %v696 = vunpack.c.h.b16 %v133
    %v697 = vunpack.c.l.b16 %v134
    %v698 = vunpack.c.h.b16 %v134
    %v699 = vunpack.c.l.b16 %v135
    %v700 = vunpack.c.h.b16 %v135
    %v701 = vunpack.c.l.b16 %v136
    %v702 = vunpack.c.h.b16 %v136
    %v703 = vunpack.c.l.b16 %v137
    %v704 = vunpack.c.h.b16 %v137
    %v705 = vunpack.c.l.b16 %v138
    %v706 = vunpack.c.h.b16 %v138
    %v707 = vunpack.c.l.b16 %v139
    %v708 = vunpack.c.h.b16 %v139
    %v709 = vunpack.c.l.b16 %v140
    %v710 = vunpack.c.h.b16 %v140
    %v711 = vunpack.c.l.b16 %v141
    %v712 = vunpack.c.h.b16 %v141
    %v713 = vunpack.c.l.b16 %v142
    %v714 = vunpack.c.h.b16 %v142
    %v715 = vunpack.c.l.b16 %v143
    %v716 = vunpack.c.h.b16 %v143
    %v717 = vunpack.c.l.b16 %v144
    %v718 = vunpack.c.h.b16 %v144
    %v719 = vunpack.c.l.b16 %v145
    %v720 = vunpack.c.h.b16 %v145
    %v721 = vunpack.c.l.b16 %v146
    %v722 = vunpack.c.h.b16 %v146
    %v723 = vunpack.c.l.b16 %v147
    %v724 = vunpack.c.h.b16 %v147
    %v725 = vunpack.c.l.b16 %v148
    %v726 = vunpack.c.h.b16 %v148
    %v727 = vunpack.c.l.b16 %v149
    %v728 = vunpack.c.h.b16 %v149
    %v729 = vunpack.c.l.b16 %v150
    %v730 = vunpack.c.h.b16 %v150
    %v731 = vunpack.c.l.b16 %v151
    %v732 = vunpack.c.h.b16 %v151
    %v733 = vunpack.c.l.b16 %v152
    %v734 = vunpack.c.h.b16 %v152
    %v735 = vunpack.c.l.b16 %v153
    %v736 = vunpack.c.h.b16 %v153
    %v737 = vunpack.c.l.b16 %v154
    %v738 = vunpack.c.h.b16 %v154
    %v739 = vunpack.c.l.b16 %v155
    %v740 = vunpack.c.h.b16 %v155
    %v741 = vunpack.c.l.b16 %v156
    %v742 = vunpack.c.h.b16 %v156
    %v743 = vunpack.c.l.b16 %v157
    %v744 = vunpack.c.h.b16 %v157
    %v745 = vunpack.c.l.b16 %v158
    %v746 = vunpack.c.h.b16 %v158
    %v747 = vunpack.c.l.b16 %v159
    %v748 = vunpack.c.h.b16 %v159
    %v749 = vunpack.c.l.b16 %v160
    %v750 = vunpack.c.h.b16 %v160
    %v751 = vunpack.c.l.b16 %v161
    %v752 = vunpack.c.h.b16 %v161
    %v753 = vunpack.c.l.b16 %v162
    %v754 = vunpack.c.h.b16 %v162
    %v755 = vunpack.c.l.b16 %v163
    %v756 = vunpack.c.h.b16 %v163
    %v757 = vunpack.c.l.b16 %v164
    %v758 = vunpack.c.h.b16 %v164
    %v759 = vunpack.c.l.b16 %v165
    %v760 = vunpack.c.h.b16 %v165
    %v761 = vunpack.c.l.b16 %v166
    %v762 = vunpack.c.h.b16 %v166
    %v763 = vunpack.c.l.b16 %v167
    %v764 = vunpack.c.h.b16 %v167
    %v765 = vunpack.c.l.b16 %v168
    %v766 = vunpack.c.h.b16 %v168
    %v767 = vunpack.c.l.b16 %v169
    %v768 = vunpack.c.h.b16 %v169
    %v769 = vunpack.c.l.b16 %v170
    %v770 = vunpack.c.h.b16 %v170
    %v771 = vunpack.c.l.b16 %v171
    %v772 = vunpack.c.h.b16 %v171
    %v773 = vunpack.c.l.b16 %v172
    %v774 = vunpack.c.h.b16 %v172
    %v775 = vunpack.c.l.b16 %v173
    %v776 = vunpack.c.h.b16 %v173
    %v777 = vunpack.c.l.b16 %v174
    %v778 = vunpack.c.h.b16 %v174
    %v779 = vunpack.c.l.b16 %v175
    %v780 = vunpack.c.h.b16 %v175
    %v781 = vunpack.c.l.b16 %v176
    %v782 = vunpack.c.h.b16 %v176
    %v783 = vunpack.c.l.b16 %v177
    %v784 = vunpack.c.h.b16 %v177
    %v785 = vunpack.c.l.b16 %v178
    %v786 = vunpack.c.h.b16 %v178
    %v787 = vunpack.c.l.b16 %v179
    %v788 = vunpack.c.h.b16 %v179
    %v789 = vunpack.c.l.b16 %v180
    %v790 = vunpack.c.h.b16 %v180
    %v791 = vunpack.c.l.b16 %v181
    %v792 = vunpack.c.h.b16 %v181
    %v793 = vunpack.c.l.b16 %v182
    %v794 = vunpack.c.h.b16 %v182
    %v795 = vunpack.c.l.b16 %v183
    %v796 = vunpack.c.h.b16 %v183
    %v797 = vunpack.c.l.b16 %v184
    %v798 = vunpack.c.h.b16 %v184
    %v799 = vunpack.c.l.b16 %v185
    %v800 = vunpack.c.h.b16 %v185
    %v801 = vunpack.c.l.b16 %v186
    %v802 = vunpack.c.h.b16 %v186
    %v803 = vunpack.c.l.b16 %v187
    %v804 = vunpack.c.h.b16 %v187
    %v805 = vunpack.c.l.b16 %v188
    %v806 = vunpack.c.h.b16 %v188
    %v807 = vunpack.c.l.b16 %v189
    %v808 = vunpack.c.h.b16 %v189
    %v809 = vunpack.c.l.b16 %v190
    %v810 = vunpack.c.h.b16 %v190
    %v811 = vunpack.c.l.b16 %v191
    %v812 = vunpack.c.h.b16 %v191
    %v813 = vunpack.c.l.b16 %v192
    %v814 = vunpack.c.h.b16 %v192
    %v815 = vunpack.c.l.b16 %v193
    %v816 = vunpack.c.h.b16 %v193
    %v817 = vunpack.c.l.b16 %v194
    %v818 = vunpack.c.h.b16 %v194
    %v819 = vunpack.c.l.b16 %v195
    %v820 = vunpack.c.h.b16 %v195
    %v821 = vunpack.c.l.b16 %v196
    %v822 = vunpack.c.h.b16 %v196
    %v823 = vunpack.c.l.b16 %v197
    %v824 = vunpack.c.h.b16 %v197
    %v825 = vunpack.c.l.b16 %v198
    %v826 = vunpack.c.h.b16 %v198
    %v827 = vunpack.c.l.b16 %v199
    %v828 = vunpack.c.h.b16 %v199
    %v829 = vunpack.c.l.b16 %v200
    %v830 = vunpack.c.h.b16 %v200
    %v831 = vunpack.c.l.b16 %v201
    %v832 = vunpack.c.h.b16 %v201
    %v833 = vunpack.c.l.b16 %v202
    %v834 = vunpack.c.h.b16 %v202
    %v835 = vunpack.c.l.b16 %v203
    %v836 = vunpack.c.h.b16 %v203
    %v837 = vunpack.c.l.b16 %v204
    %v838 = vunpack.c.h.b16 %v204
    %v839 = vunpack.c.l.b16 %v205
    %v840 = vunpack.c.h.b16 %v205
    %v841 = vunpack.c.l.b16 %v206
    %v842 = vunpack.c.h.b16 %v206
    %v843 = vunpack.c.l.b16 %v207
    %v844 = vunpack.c.h.b16 %v207
    %v845 = vunpack.c.l.b16 %v208
    %v846 = vunpack.c.h.b16 %v208
    %v847 = vunpack.c.l.b16 %v209
    %v848 = vunpack.c.h.b16 %v209
    %v849 = vunpack.c.l.b16 %v210
    %v850 = vunpack.c.h.b16 %v210
    %v851 = vunpack.c.l.b16 %v211
    %v852 = vunpack.c.h.b16 %v211
    %v853 = vunpack.c.l.b16 %v212
    %v854 = vunpack.c.h.b16 %v212
    %v855 = vunpack.c.l.b16 %v213
    %v856 = vunpack.c.h.b16 %v213
    %v857 = vunpack.c.l.b16 %v214
    %v858 = vunpack.c.h.b16 %v214
    %v859 = vunpack.c.l.b16 %v215
    %v860 = vunpack.c.h.b16 %v215
    %v861 = vunpack.c.l.b16 %v216
    %v862 = vunpack.c.h.b16 %v216
    %v863 = vunpack.c.l.b16 %v217
    %v864 = vunpack.c.h.b16 %v217
    %v865 = vunpack.c.l.b16 %v218
    %v866 = vunpack.c.h.b16 %v218
    %v867 = vunpack.c.l.b16 %v219
    %v868 = vunpack.c.h.b16 %v219
    %v869 = vunpack.c.l.b16 %v220
    %v870 = vunpack.c.h.b16 %v220
    %v871 = vunpack.c.l.b16 %v221
    %v872 = vunpack.c.h.b16 %v221
    %v873 = vunpack.c.l.b16 %v222
    %v874 = vunpack.c.h.b16 %v222
    %v875 = vunpack.c.l.b16 %v223
    %v876 = vunpack.c.h.b16 %v223
    %v877 = vunpack.c.l.b16 %v224
    %v878 = vunpack.c.h.b16 %v224
    %v879 = vunpack.c.l.b16 %v225
    %v880 = vunpack.c.h.b16 %v225
    %v881 = vunpack.c.l.b16 %v226
    %v882 = vunpack.c.h.b16 %v226
    %v883 = vunpack.c.l.b16 %v227
    %v884 = vunpack.c.h.b16 %v227
    %v885 = vunpack.c.l.b16 %v228
    %v886 = vunpack.c.h.b16 %v228
    %v887 = vunpack.c.l.b16 %v229
    %v888 = vunpack.c.h.b16 %v229
    %v889 = vunpack.c.l.b16 %v230
    %v890 = vunpack.c.h.b16 %v230
    %v891 = vunpack.c.l.b16 %v231
    %v892 = vunpack.c.h.b16 %v231
    %v893 = vunpack.c.l.b16 %v232
    %v894 = vunpack.c.h.b16 %v232
    %v895 = vunpack.c.l.b16 %v233
    %v896 = vunpack.c.h.b16 %v233
    %v897 = vunpack.c.l.b16 %v234
    %v898 = vunpack.c.h.b16 %v234
    %v899 = vunpack.c.l.b16 %v235
    %v900 = vunpack.c.h.b16 %v235
    %v901 = vunpack.c.l.b16 %v236
    %v902 = vunpack.c.h.b16 %v236
    %v903 = vunpack.c.l.b16 %v237
    %v904 = vunpack.c.h.b16 %v237
    %v905 = vunpack.c.l.b16 %v238
    %v906 = vunpack.c.h.b16 %v238
    %v907 = vunpack.c.l.b16 %v239
    %v908 = vunpack.c.h.b16 %v239
    %v909 = vunpack.c.l.b16 %v240
    %v910 = vunpack.c.h.b16 %v240
    %v911 = vunpack.c.l.b16 %v241
    %v912 = vunpack.c.h.b16 %v241
    %v913 = vunpack.c.l.b16 %v242
    %v914 = vunpack.c.h.b16 %v242
    %v915 = vunpack.c.l.b16 %v243
    %v916 = vunpack.c.h.b16 %v243
    %v917 = vunpack.c.l.b16 %v244
    %v918 = vunpack.c.h.b16 %v244
    %v919 = vunpack.c.l.b16 %v245
    %v920 = vunpack.c.h.b16 %v245
    %v921 = vunpack.c.l.b16 %v246
    %v922 = vunpack.c.h.b16 %v246
    %v923 = vunpack.c.l.b16 %v247
    %v924 = vunpack.c.h.b16 %v247
    %v925 = vunpack.c.l.b16 %v248
    %v926 = vunpack.c.h.b16 %v248
    %v927 = vunpack.c.l.b16 %v249
    %v928 = vunpack.c.h.b16 %v249
    %v929 = vunpack.c.l.b16 %v250
    %v930 = vunpack.c.h.b16 %v250
    %v931 = vunpack.c.l.b16 %v251
    %v932 = vunpack.c.h.b16 %v251
    %v933 = vunpack.c.l.b16 %v252
    %v934 = vunpack.c.h.b16 %v252
    %v935 = vunpack.c.l.b16 %v253
    %v936 = vunpack.c.h.b16 %v253
    %v937 = vunpack.c.l.b16 %v254
    %v938 = vunpack.c.h.b16 %v254
    %v939 = vunpack.c.l.b16 %v255
    %v940 = vunpack.c.h.b16 %v255
    %v941 = vunpack.c.l.b16 %v256
    %v942 = vunpack.c.h.b16 %v256
    %v943 = vunpack.c.l.b16 %v257
    %v944 = vunpack.c.h.b16 %v257
    %v945 = vunpack.c.l.b16 %v258
    %v946 = vunpack.c.h.b16 %v258
    %v947 = vunpack.c.l.b16 %v259
    %v948 = vunpack.c.h.b16 %v259
    %v949 = vunpack.c.l.b16 %v260
    %v950 = vunpack.c.h.b16 %v260
    %v951 = vunpack.c.l.b16 %v261
    %v952 = vunpack.c.h.b16 %v261
    %v953 = vunpack.c.l.b16 %v262
    %v954 = vunpack.c.h.b16 %v262
    %v955 = vunpack.c.l.b16 %v263
    %v956 = vunpack.c.h.b16 %v263
    %v957 = vunpack.c.l.b16 %v264
    %v958 = vunpack.c.h.b16 %v264
    %v959 = vunpack.c.l.b16 %v265
    %v960 = vunpack.c.h.b16 %v265
    %v961 = vunpack.c.l.b16 %v266
    %v962 = vunpack.c.h.b16 %v266
    %v963 = vunpack.c.l.b16 %v267
    %v964 = vunpack.c.h.b16 %v267
    %v965 = vunpack.c.l.b16 %v268
    %v966 = vunpack.c.h.b16 %v268
    %v967 = vunpack.c.l.b16 %v269
    %v968 = vunpack.c.h.b16 %v269
    %v969 = vunpack.c.l.b16 %v270
    %v970 = vunpack.c.h.b16 %v270
    %v971 = vunpack.c.l.b16 %v271
    %v972 = vunpack.c.h.b16 %v271
    %v973 = vunpack.c.l.b16 %v272
    %v974 = vunpack.c.h.b16 %v272
    %v975 = vunpack.c.l.b16 %v273
    %v976 = vunpack.c.h.b16 %v273
    %v977 = vunpack.c.l.b16 %v274
    %v978 = vunpack.c.h.b16 %v274
    %v979 = vunpack.c.l.b16 %v275
    %v980 = vunpack.c.h.b16 %v275
    %v981 = vunpack.c.l.b16 %v276
    %v982 = vunpack.c.h.b16 %v276
    %v983 = vunpack.c.l.b16 %v277
    %v984 = vunpack.c.h.b16 %v277
    %v985 = vunpack.c.l.b16 %v278
    %v986 = vunpack.c.h.b16 %v278
    %v987 = vunpack.c.l.b16 %v279
    %v988 = vunpack.c.h.b16 %v279
    %v989 = vunpack.c.l.b16 %v280
    %v990 = vunpack.c.h.b16 %v280
    %v991 = vunpack.c.l.b16 %v281
    %v992 = vunpack.c.h.b16 %v281
    %v993 = vunpack.c.l.b16 %v282
    %v994 = vunpack.c.h.b16 %v282
    %v995 = vunpack.c.l.b16 %v283
    %v996 = vunpack.c.h.b16 %v283
    %v997 = vunpack.c.l.b16 %v284
    %v998 = vunpack.c.h.b16 %v284
    %v999 = vunpack.c.l.b16 %v285
    %v1000 = vunpack.c.h.b16 %v285
    %v1001 = vunpack.c.l.b16 %v286
    %v1002 = vunpack.c.h.b16 %v286
    %v1003 = vunpack.c.l.b16 %v287
    %v1004 = vunpack.c.h.b16 %v287
    %v1005 = vunpack.c.l.b16 %v288
    %v1006 = vunpack.c.h.b16 %v288
    %v1007 = vunpack.c.l.b16 %v289
    %v1008 = vunpack.c.h.b16 %v289
    %v1009 = vpack.c.b16 %v565, %v561
    %v1010 = vpack.c.b16 %v566, %v562
    %v1011 = vpack.c.b16 %v567, %v563
    %v1012 = vpack.c.b16 %v568, %v564
    %v1013 = vpack.c.b16 %v573, %v569
    %v1014 = vpack.c.b16 %v574, %v570
    %v1015 = vpack.c.b16 %v575, %v571
    %v1016 = vpack.c.b16 %v576, %v572
    %v1017 = vpack.c.b16 %v581, %v577
    %v1018 = vpack.c.b16 %v582, %v578
    %v1019 = vpack.c.b16 %v583, %v579
    %v1020 = vpack.c.b16 %v584, %v580
    %v1021 = vpack.c.b16 %v589, %v585
    %v1022 = vpack.c.b16 %v590, %v586
    %v1023 = vpack.c.b16 %v591, %v587
    %v1024 = vpack.c.b16 %v592, %v588
    %v1025 = vpack.c.b16 %v597, %v593
    %v1026 = vpack.c.b16 %v598, %v594
    %v1027 = vpack.c.b16 %v599, %v595
    %v1028 = vpack.c.b16 %v600, %v596
    %v1029 = vpack.c.b16 %v605, %v601
    %v1030 = vpack.c.b16 %v606, %v602
    %v1031 = vpack.c.b16 %v607, %v603
    %v1032 = vpack.c.b16 %v608, %v604
    %v1033 = vpack.c.b16 %v613, %v609
    %v1034 = vpack.c.b16 %v614, %v610
    %v1035 = vpack.c.b16 %v615, %v611
    %v1036 = vpack.c.b16 %v616, %v612
    %v1037 = vpack.c.b16 %v621, %v617
    %v1038 = vpack.c.b16 %v622, %v618
    %v1039 = vpack.c.b16 %v623, %v619
    %v1040 = vpack.c.b16 %v624, %v620
    %v1041 = vpack.c.b16 %v629, %v625
    %v1042 = vpack.c.b16 %v630, %v626
    %v1043 = vpack.c.b16 %v631, %v627
    %v1044 = vpack.c.b16 %v632, %v628
    %v1045 = vpack.c.b16 %v637, %v633
    %v1046 = vpack.c.b16 %v638, %v634
    %v1047 = vpack.c.b16 %v639, %v635
    %v1048 = vpack.c.b16 %v640, %v636
    %v1049 = vpack.c.b16 %v645, %v641
    %v1050 = vpack.c.b16 %v646, %v642
    %v1051 = vpack.c.b16 %v647, %v643
    %v1052 = vpack.c.b16 %v648, %v644
    %v1053 = vpack.c.b16 %v653, %v649
    %v1054 = vpack.c.b16 %v654, %v650
    %v1055 = vpack.c.b16 %v655, %v651
    %v1056 = vpack.c.b16 %v656, %v652
    %v1057 = vpack.c.b16 %v661, %v657
    %v1058 = vpack.c.b16 %v662, %v658
    %v1059 = vpack.c.b16 %v663, %v659
    %v1060 = vpack.c.b16 %v664, %v660
    %v1061 = vpack.c.b16 %v669, %v665
    %v1062 = vpack.c.b16 %v670, %v666
    %v1063 = vpack.c.b16 %v671, %v667
    %v1064 = vpack.c.b16 %v672, %v668
    %v1065 = vpack.c.b16 %v677, %v673
    %v1066 = vpack.c.b16 %v678, %v674
    %v1067 = vpack.c.b16 %v679, %v675
    %v1068 = vpack.c.b16 %v680, %v676
    %v1069 = vpack.c.b16 %v685, %v681
    %v1070 = vpack.c.b16 %v686, %v682
    %v1071 = vpack.c.b16 %v687, %v683
    %v1072 = vpack.c.b16 %v688, %v684
    %v1073 = vpack.c.b16 %v693, %v689
    %v1074 = vpack.c.b16 %v694, %v690
    %v1075 = vpack.c.b16 %v695, %v691
    %v1076 = vpack.c.b16 %v696, %v692
    %v1077 = vpack.c.b16 %v701, %v697
    %v1078 = vpack.c.b16 %v702, %v698
    %v1079 = vpack.c.b16 %v703, %v699
    %v1080 = vpack.c.b16 %v704, %v700
    %v1081 = vpack.c.b16 %v709, %v705
    %v1082 = vpack.c.b16 %v710, %v706
    %v1083 = vpack.c.b16 %v711, %v707
    %v1084 = vpack.c.b16 %v712, %v708
    %v1085 = vpack.c.b16 %v717, %v713
    %v1086 = vpack.c.b16 %v718, %v714
    %v1087 = vpack.c.b16 %v719, %v715
    %v1088 = vpack.c.b16 %v720, %v716
    %v1089 = vpack.c.b16 %v725, %v721
    %v1090 = vpack.c.b16 %v726, %v722
    %v1091 = vpack.c.b16 %v727, %v723
    %v1092 = vpack.c.b16 %v728, %v724
    %v1093 = vpack.c.b16 %v733, %v729
    %v1094 = vpack.c.b16 %v734, %v730
    %v1095 = vpack.c.b16 %v735, %v731
    %v1096 = vpack.c.b16 %v736, %v732
    %v1097 = vpack.c.b16 %v741, %v737
    %v1098 = vpack.c.b16 %v742, %v738
    %v1099 = vpack.c.b16 %v743, %v739
    %v1100 = vpack.c.b16 %v744, %v740
    %v1101 = vpack.c.b16 %v749, %v745
    %v1102 = vpack.c.b16 %v750, %v746
    %v1103 = vpack.c.b16 %v751, %v747
    %v1104 = vpack.c.b16 %v752, %v748
    %v1105 = vpack.c.b16 %v757, %v753
    %v1106 = vpack.c.b16 %v758, %v754
    %v1107 = vpack.c.b16 %v759, %v755
    %v1108 = vpack.c.b16 %v760, %v756
    %v1109 = vpack.c.b16 %v765, %v761
    %v1110 = vpack.c.b16 %v766, %v762
    %v1111 = vpack.c.b16 %v767, %v763
    %v1112 = vpack.c.b16 %v768, %v764
    %v1113 = vpack.c.b16 %v773, %v769
    %v1114 = vpack.c.b16 %v774, %v770
    %v1115 = vpack.c.b16 %v775, %v771
    %v1116 = vpack.c.b16 %v776, %v772
    %v1117 = vpack.c.b16 %v781, %v777
    %v1118 = vpack.c.b16 %v782, %v778
    %v1119 = vpack.c.b16 %v783, %v779
    %v1120 = vpack.c.b16 %v784, %v780
    %v1121 = vpack.c.b16 %v789, %v785
    %v1122 = vpack.c.b16 %v790, %v786
    %v1123 = vpack.c.b16 %v791, %v787
    %v1124 = vpack.c.b16 %v792, %v788
    %v1125 = vpack.c.b16 %v797, %v793
    %v1126 = vpack.c.b16 %v798, %v794
    %v1127 = vpack.c.b16 %v799, %v795
    %v1128 = vpack.c.b16 %v800, %v796
    %v1129 = vpack.c.b16 %v805, %v801
    %v1130 = vpack.c.b16 %v806, %v802
    %v1131 = vpack.c.b16 %v807, %v803
    %v1132 = vpack.c.b16 %v808, %v804
    %v1133 = vpack.c.b16 %v813, %v809
    %v1134 = vpack.c.b16 %v814, %v810
    %v1135 = vpack.c.b16 %v815, %v811
    %v1136 = vpack.c.b16 %v816, %v812
    %v1137 = vpack.c.b16 %v821, %v817
    %v1138 = vpack.c.b16 %v822, %v818
    %v1139 = vpack.c.b16 %v823, %v819
    %v1140 = vpack.c.b16 %v824, %v820
    %v1141 = vpack.c.b16 %v829, %v825
    %v1142 = vpack.c.b16 %v830, %v826
    %v1143 = vpack.c.b16 %v831, %v827
    %v1144 = vpack.c.b16 %v832, %v828
    %v1145 = vpack.c.b16 %v837, %v833
    %v1146 = vpack.c.b16 %v838, %v834
    %v1147 = vpack.c.b16 %v839, %v835
    %v1148 = vpack.c.b16 %v840, %v836
    %v1149 = vpack.c.b16 %v845, %v841
    %v1150 = vpack.c.b16 %v846, %v842
    %v1151 = vpack.c.b16 %v847, %v843
    %v1152 = vpack.c.b16 %v848, %v844
    %v1153 = vpack.c.b16 %v853, %v849
    %v1154 = vpack.c.b16 %v854, %v850
    %v1155 = vpack.c.b16 %v855, %v851
    %v1156 = vpack.c.b16 %v856, %v852
    %v1157 = vpack.c.b16 %v861, %v857
    %v1158 = vpack.c.b16 %v862, %v858
    %v1159 = vpack.c.b16 %v863, %v859
    %v1160 = vpack.c.b16 %v864, %v860
    %v1161 = vpack.c.b16 %v869, %v865
    %v1162 = vpack.c.b16 %v870, %v866
    %v1163 = vpack.c.b16 %v871, %v867
    %v1164 = vpack.c.b16 %v872, %v868
    %v1165 = vpack.c.b16 %v877, %v873
    %v1166 = vpack.c.b16 %v878, %v874
    %v1167 = vpack.c.b16 %v879, %v875
    %v1168 = vpack.c.b16 %v880, %v876
    %v1169 = vpack.c.b16 %v885, %v881
    %v1170 = vpack.c.b16 %v886, %v882
    %v1171 = vpack.c.b16 %v887, %v883
    %v1172 = vpack.c.b16 %v888, %v884
    %v1173 = vpack.c.b16 %v893, %v889
    %v1174 = vpack.c.b16 %v894, %v890
    %v1175 = vpack.c.b16 %v895, %v891
    %v1176 = vpack.c.b16 %v896, %v892
    %v1177 = vpack.c.b16 %v901, %v897
    %v1178 = vpack.c.b16 %v902, %v898
    %v1179 = vpack.c.b16 %v903, %v899
    %v1180 = vpack.c.b16 %v904, %v900
    %v1181 = vpack.c.b16 %v909, %v905
    %v1182 = vpack.c.b16 %v910, %v906
    %v1183 = vpack.c.b16 %v911, %v907
    %v1184 = vpack.c.b16 %v912, %v908
    %v1185 = vpack.c.b16 %v917, %v913
    %v1186 = vpack.c.b16 %v918, %v914
    %v1187 = vpack.c.b16 %v919, %v915
    %v1188 = vpack.c.b16 %v920, %v916
    %v1189 = vpack.c.b16 %v925, %v921
    %v1190 = vpack.c.b16 %v926, %v922
    %v1191 = vpack.c.b16 %v927, %v923
    %v1192 = vpack.c.b16 %v928, %v924
    %v1193 = vpack.c.b16 %v933, %v929
    %v1194 = vpack.c.b16 %v934, %v930
    %v1195 = vpack.c.b16 %v935, %v931
    %v1196 = vpack.c.b16 %v936, %v932
    %v1197 = vpack.c.b16 %v941, %v937
    %v1198 = vpack.c.b16 %v942, %v938
    %v1199 = vpack.c.b16 %v943, %v939
    %v1200 = vpack.c.b16 %v944, %v940
    %v1201 = vpack.c.b16 %v949, %v945
    %v1202 = vpack.c.b16 %v950, %v946
    %v1203 = vpack.c.b16 %v951, %v947
    %v1204 = vpack.c.b16 %v952, %v948
    %v1205 = vpack.c.b16 %v957, %v953
    %v1206 = vpack.c.b16 %v958, %v954
    %v1207 = vpack.c.b16 %v959, %v955
    %v1208 = vpack.c.b16 %v960, %v956
    %v1209 = vpack.c.b16 %v965, %v961
    %v1210 = vpack.c.b16 %v966, %v962
    %v1211 = vpack.c.b16 %v967, %v963
    %v1212 = vpack.c.b16 %v968, %v964
    %v1213 = vpack.c.b16 %v973, %v969
    %v1214 = vpack.c.b16 %v974, %v970
    %v1215 = vpack.c.b16 %v975, %v971
    %v1216 = vpack.c.b16 %v976, %v972
    %v1217 = vpack.c.b16 %v981, %v977
    %v1218 = vpack.c.b16 %v982, %v978
    %v1219 = vpack.c.b16 %v983, %v979
    %v1220 = vpack.c.b16 %v984, %v980
    %v1221 = vpack.c.b16 %v989, %v985
    %v1222 = vpack.c.b16 %v990, %v986
    %v1223 = vpack.c.b16 %v991, %v987
    %v1224 = vpack.c.b16 %v992, %v988
    %v1225 = vpack.c.b16 %v997, %v993
    %v1226 = vpack.c.b16 %v998, %v994
    %v1227 = vpack.c.b16 %v999, %v995
    %v1228 = vpack.c.b16 %v1000, %v996
    %v1229 = vpack.c.b16 %v1005, %v1001
    %v1230 = vpack.c.b16 %v1006, %v1002
    %v1231 = vpack.c.b16 %v1007, %v1003
    %v1232 = vpack.c.b16 %v1008, %v1004
    %1457 = vmatprep.subr.bf16.mxu0 %v1038
    %1458 = vmatpush1.bf16.msra.mxu0 %v1037
    %1459 = vmatprep.subr.bf16.mxu0 %v1034
    %1460 = vmatpush1.bf16.msra.mxu0 %v1033
    %1461 = vmatprep.subr.bf16.mxu0 %v1030
    %1462 = vmatpush1.bf16.msra.mxu0 %v1029
    %1463 = vmatprep.subr.bf16.mxu0 %v1026
    %1464 = vmatpush1.bf16.msra.mxu0 %v1025
    %1465 = vmatprep.subr.bf16.mxu0 %v1022
    %1466 = vmatpush1.bf16.msra.mxu0 %v1021
    %1467 = vmatprep.subr.bf16.mxu0 %v1018
    %1468 = vmatpush1.bf16.msra.mxu0 %v1017
    %1469 = vmatprep.subr.bf16.mxu0 %v1014
    %1470 = vmatpush1.bf16.msra.mxu0 %v1013
    %1471 = vmatprep.subr.bf16.mxu0 %v1010
    %1472 = vmatpush1.bf16.msra.mxu0 %v1009
    %1473 = vmatprep.subr.bf16.mxu0 %v1070
    %1474 = vmatpush2.bf16.msra.mxu0 %v1069
    %1475 = vmatprep.subr.bf16.mxu0 %v1066
    %1476 = vmatpush2.bf16.msra.mxu0 %v1065
    %1477 = vmatprep.subr.bf16.mxu0 %v1062
    %1478 = vmatpush2.bf16.msra.mxu0 %v1061
    %1479 = vmatprep.subr.bf16.mxu0 %v1058
    %1480 = vmatpush2.bf16.msra.mxu0 %v1057
    %1481 = vmatprep.subr.bf16.mxu0 %v1054
    %1482 = vmatpush2.bf16.msra.mxu0 %v1053
    %1483 = vmatprep.subr.bf16.mxu0 %v1050
    %1484 = vmatpush2.bf16.msra.mxu0 %v1049
    %1485 = vmatprep.subr.bf16.mxu0 %v1046
    %1486 = vmatpush2.bf16.msra.mxu0 %v1045
    %1487 = vmatprep.subr.bf16.mxu0 %v1042
    %1488 = vmatpush2.bf16.msra.mxu0 %v1041
    %1489 = vmatprep.mubr.bf16.mxu0 %v324
    %1490 = vmatmul.mubr.bf16.gmra.mxu0 %v323
    %v1491 = vpop.f32.mrf.mxu0
    %v1492 = vadd.f32 %v295, %v1491
    %v1493 = vpop.f32.mrf.mxu0
    %v1494 = vadd.f32 %v299, %v1493
    %v1495 = vpop.f32.mrf.mxu0
    %v1496 = vpop.f32.mrf.mxu0
    %1497 = vdwg.mxu0
    %1498 = vmatprep.subr.bf16.mxu0 %v1102
    %1499 = vmatpush1.bf16.msra.mxu0 %v1101
    %1500 = vmatprep.subr.bf16.mxu0 %v1098
    %1501 = vmatpush1.bf16.msra.mxu0 %v1097
    %1502 = vmatprep.subr.bf16.mxu0 %v1094
    %1503 = vmatpush1.bf16.msra.mxu0 %v1093
    %1504 = vmatprep.subr.bf16.mxu0 %v1090
    %1505 = vmatpush1.bf16.msra.mxu0 %v1089
    %1506 = vmatprep.subr.bf16.mxu0 %v1086
    %1507 = vmatpush1.bf16.msra.mxu0 %v1085
    %1508 = vmatprep.subr.bf16.mxu0 %v1082
    %1509 = vmatpush1.bf16.msra.mxu0 %v1081
    %1510 = vmatprep.subr.bf16.mxu0 %v1078
    %1511 = vmatpush1.bf16.msra.mxu0 %v1077
    %1512 = vmatprep.subr.bf16.mxu0 %v1074
    %1513 = vmatpush1.bf16.msra.mxu0 %v1073
    %1514 = vmatprep.subr.bf16.mxu0 %v1134
    %1515 = vmatpush2.bf16.msra.mxu0 %v1133
    %1516 = vmatprep.subr.bf16.mxu0 %v1130
    %1517 = vmatpush2.bf16.msra.mxu0 %v1129
    %1518 = vmatprep.subr.bf16.mxu0 %v1126
    %1519 = vmatpush2.bf16.msra.mxu0 %v1125
    %1520 = vmatprep.subr.bf16.mxu0 %v1122
    %1521 = vmatpush2.bf16.msra.mxu0 %v1121
    %1522 = vmatprep.subr.bf16.mxu0 %v1118
    %1523 = vmatpush2.bf16.msra.mxu0 %v1117
    %1524 = vmatprep.subr.bf16.mxu0 %v1114
    %1525 = vmatpush2.bf16.msra.mxu0 %v1113
    %1526 = vmatprep.subr.bf16.mxu0 %v1110
    %1527 = vmatpush2.bf16.msra.mxu0 %v1109
    %1528 = vmatprep.subr.bf16.mxu0 %v1106
    %1529 = vmatpush2.bf16.msra.mxu0 %v1105
    %1530 = vmatprep.mubr.bf16.mxu0 %v326
    %1531 = vmatmul.mubr.bf16.gmra.mxu0 %v325
    %v1532 = vpop.f32.mrf.mxu0
    %v1533 = vadd.f32 %v1492, %v1532
    %v1534 = vpop.f32.mrf.mxu0
    %v1535 = vadd.f32 %v1494, %v1534
    %v1536 = vpop.f32.mrf.mxu0
    %v1537 = vpop.f32.mrf.mxu0
    %1538 = vdwg.mxu0
    %1539 = vmatprep.subr.bf16.mxu0 %v1166
    %1540 = vmatpush1.bf16.msra.mxu0 %v1165
    %1541 = vmatprep.subr.bf16.mxu0 %v1162
    %1542 = vmatpush1.bf16.msra.mxu0 %v1161
    %1543 = vmatprep.subr.bf16.mxu0 %v1158
    %1544 = vmatpush1.bf16.msra.mxu0 %v1157
    %1545 = vmatprep.subr.bf16.mxu0 %v1154
    %1546 = vmatpush1.bf16.msra.mxu0 %v1153
    %1547 = vmatprep.subr.bf16.mxu0 %v1150
    %1548 = vmatpush1.bf16.msra.mxu0 %v1149
    %1549 = vmatprep.subr.bf16.mxu0 %v1146
    %1550 = vmatpush1.bf16.msra.mxu0 %v1145
    %1551 = vmatprep.subr.bf16.mxu0 %v1142
    %1552 = vmatpush1.bf16.msra.mxu0 %v1141
    %1553 = vmatprep.subr.bf16.mxu0 %v1138
    %1554 = vmatpush1.bf16.msra.mxu0 %v1137
    %1555 = vmatprep.subr.bf16.mxu0 %v1198
    %1556 = vmatpush2.bf16.msra.mxu0 %v1197
    %1557 = vmatprep.subr.bf16.mxu0 %v1194
    %1558 = vmatpush2.bf16.msra.mxu0 %v1193
    %1559 = vmatprep.subr.bf16.mxu0 %v1190
    %1560 = vmatpush2.bf16.msra.mxu0 %v1189
    %1561 = vmatprep.subr.bf16.mxu0 %v1186
    %1562 = vmatpush2.bf16.msra.mxu0 %v1185
    %1563 = vmatprep.subr.bf16.mxu0 %v1182
    %1564 = vmatpush2.bf16.msra.mxu0 %v1181
    %1565 = vmatprep.subr.bf16.mxu0 %v1178
    %1566 = vmatpush2.bf16.msra.mxu0 %v1177
    %1567 = vmatprep.subr.bf16.mxu0 %v1174
    %1568 = vmatpush2.bf16.msra.mxu0 %v1173
    %1569 = vmatprep.subr.bf16.mxu0 %v1170
    %1570 = vmatpush2.bf16.msra.mxu0 %v1169
    %1571 = vmatprep.mubr.bf16.mxu0 %v328
    %1572 = vmatmul.mubr.bf16.gmra.mxu0 %v327
    %v1573 = vpop.f32.mrf.mxu0
    %v1574 = vadd.f32 %v1533, %v1573
    %v1575 = vpop.f32.mrf.mxu0
    %v1576 = vadd.f32 %v1535, %v1575
    %v1577 = vpop.f32.mrf.mxu0
    %v1578 = vpop.f32.mrf.mxu0
    %1579 = vdwg.mxu0
    %1580 = vmatprep.subr.bf16.mxu0 %v1230
    %1581 = vmatpush1.bf16.msra.mxu0 %v1229
    %1582 = vmatprep.subr.bf16.mxu0 %v1226
    %1583 = vmatpush1.bf16.msra.mxu0 %v1225
    %1584 = vmatprep.subr.bf16.mxu0 %v1222
    %1585 = vmatpush1.bf16.msra.mxu0 %v1221
    %1586 = vmatprep.subr.bf16.mxu0 %v1218
    %1587 = vmatpush1.bf16.msra.mxu0 %v1217
    %1588 = vmatprep.subr.bf16.mxu0 %v1214
    %1589 = vmatpush1.bf16.msra.mxu0 %v1213
    %1590 = vmatprep.subr.bf16.mxu0 %v1210
    %1591 = vmatpush1.bf16.msra.mxu0 %v1209
    %1592 = vmatprep.subr.bf16.mxu0 %v1206
    %1593 = vmatpush1.bf16.msra.mxu0 %v1205
    %1594 = vmatprep.subr.bf16.mxu0 %v1202
    %1595 = vmatpush1.bf16.msra.mxu0 %v1201
    %1596 = vmatprep.subr.bf16.mxu0 0
    %1597 = vmatpush2.bf16.msra.mxu0 0
    %1598 = vmatprep.subr.bf16.mxu0 0
    %1599 = vmatpush2.bf16.msra.mxu0 0
    %1600 = vmatprep.subr.bf16.mxu0 0
    %1601 = vmatpush2.bf16.msra.mxu0 0
    %1602 = vmatprep.subr.bf16.mxu0 0
    %1603 = vmatpush2.bf16.msra.mxu0 0
    %1604 = vmatprep.subr.bf16.mxu0 0
    %1605 = vmatpush2.bf16.msra.mxu0 0
    %1606 = vmatprep.subr.bf16.mxu0 0
    %1607 = vmatpush2.bf16.msra.mxu0 0
    %1608 = vmatprep.subr.bf16.mxu0 0
    %1609 = vmatpush2.bf16.msra.mxu0 0
    %1610 = vmatprep.subr.bf16.mxu0 0
    %1611 = vmatpush2.bf16.msra.mxu0 0
    %1612 = vmatprep.mubr.bf16.mxu0 0
    %1613 = vmatmul.mubr.bf16.gmra.mxu0 %v329
    %v1614 = vpop.f32.mrf.mxu0
    %v1615 = vadd.f32 %v1574, %v1614
    %v1616 = vpop.f32.mrf.mxu0
    %v1617 = vadd.f32 %v1576, %v1616
    %v1618 = vpop.f32.mrf.mxu0
    %v1619 = vpop.f32.mrf.mxu0
    %1620 = vdwg.mxu0
    %1621 = vmatprep.subr.bf16.mxu0 %v1040
    %1622 = vmatpush1.bf16.msra.mxu0 %v1039
    %1623 = vmatprep.subr.bf16.mxu0 %v1036
    %1624 = vmatpush1.bf16.msra.mxu0 %v1035
    %1625 = vmatprep.subr.bf16.mxu0 %v1032
    %1626 = vmatpush1.bf16.msra.mxu0 %v1031
    %1627 = vmatprep.subr.bf16.mxu0 %v1028
    %1628 = vmatpush1.bf16.msra.mxu0 %v1027
    %1629 = vmatprep.subr.bf16.mxu0 %v1024
    %1630 = vmatpush1.bf16.msra.mxu0 %v1023
    %1631 = vmatprep.subr.bf16.mxu0 %v1020
    %1632 = vmatpush1.bf16.msra.mxu0 %v1019
    %1633 = vmatprep.subr.bf16.mxu0 %v1016
    %1634 = vmatpush1.bf16.msra.mxu0 %v1015
    %1635 = vmatprep.subr.bf16.mxu0 %v1012
    %1636 = vmatpush1.bf16.msra.mxu0 %v1011
    %1637 = vmatprep.subr.bf16.mxu0 %v1072
    %1638 = vmatpush2.bf16.msra.mxu0 %v1071
    %1639 = vmatprep.subr.bf16.mxu0 %v1068
    %1640 = vmatpush2.bf16.msra.mxu0 %v1067
    %1641 = vmatprep.subr.bf16.mxu0 %v1064
    %1642 = vmatpush2.bf16.msra.mxu0 %v1063
    %1643 = vmatprep.subr.bf16.mxu0 %v1060
    %1644 = vmatpush2.bf16.msra.mxu0 %v1059
    %1645 = vmatprep.subr.bf16.mxu0 %v1056
    %1646 = vmatpush2.bf16.msra.mxu0 %v1055
    %1647 = vmatprep.subr.bf16.mxu0 %v1052
    %1648 = vmatpush2.bf16.msra.mxu0 %v1051
    %1649 = vmatprep.subr.bf16.mxu0 %v1048
    %1650 = vmatpush2.bf16.msra.mxu0 %v1047
    %1651 = vmatprep.subr.bf16.mxu0 %v1044
    %1652 = vmatpush2.bf16.msra.mxu0 %v1043
    %1653 = vmatprep.mubr.bf16.mxu0 %v324
    %1654 = vmatmul.mubr.bf16.gmra.mxu0 %v323
    %v1655 = vpop.f32.mrf.mxu0
    %v1656 = vadd.f32 %v303, %v1655
    %v1657 = vpop.f32.mrf.mxu0
    %v1658 = vadd.f32 %v307, %v1657
    %v1659 = vpop.f32.mrf.mxu0
    %v1660 = vpop.f32.mrf.mxu0
    %1661 = vdwg.mxu0
    %1662 = vmatprep.subr.bf16.mxu0 %v1104
    %1663 = vmatpush1.bf16.msra.mxu0 %v1103
    %1664 = vmatprep.subr.bf16.mxu0 %v1100
    %1665 = vmatpush1.bf16.msra.mxu0 %v1099
    %1666 = vmatprep.subr.bf16.mxu0 %v1096
    %1667 = vmatpush1.bf16.msra.mxu0 %v1095
    %1668 = vmatprep.subr.bf16.mxu0 %v1092
    %1669 = vmatpush1.bf16.msra.mxu0 %v1091
    %1670 = vmatprep.subr.bf16.mxu0 %v1088
    %1671 = vmatpush1.bf16.msra.mxu0 %v1087
    %1672 = vmatprep.subr.bf16.mxu0 %v1084
    %1673 = vmatpush1.bf16.msra.mxu0 %v1083
    %1674 = vmatprep.subr.bf16.mxu0 %v1080
    %1675 = vmatpush1.bf16.msra.mxu0 %v1079
    %1676 = vmatprep.subr.bf16.mxu0 %v1076
    %1677 = vmatpush1.bf16.msra.mxu0 %v1075
    %1678 = vmatprep.subr.bf16.mxu0 %v1136
    %1679 = vmatpush2.bf16.msra.mxu0 %v1135
    %1680 = vmatprep.subr.bf16.mxu0 %v1132
    %1681 = vmatpush2.bf16.msra.mxu0 %v1131
    %1682 = vmatprep.subr.bf16.mxu0 %v1128
    %1683 = vmatpush2.bf16.msra.mxu0 %v1127
    %1684 = vmatprep.subr.bf16.mxu0 %v1124
    %1685 = vmatpush2.bf16.msra.mxu0 %v1123
    %1686 = vmatprep.subr.bf16.mxu0 %v1120
    %1687 = vmatpush2.bf16.msra.mxu0 %v1119
    %1688 = vmatprep.subr.bf16.mxu0 %v1116
    %1689 = vmatpush2.bf16.msra.mxu0 %v1115
    %1690 = vmatprep.subr.bf16.mxu0 %v1112
    %1691 = vmatpush2.bf16.msra.mxu0 %v1111
    %1692 = vmatprep.subr.bf16.mxu0 %v1108
    %1693 = vmatpush2.bf16.msra.mxu0 %v1107
    %1694 = vmatprep.mubr.bf16.mxu0 %v326
    %1695 = vmatmul.mubr.bf16.gmra.mxu0 %v325
    %v1696 = vpop.f32.mrf.mxu0
    %v1697 = vadd.f32 %v1656, %v1696
    %v1698 = vpop.f32.mrf.mxu0
    %v1699 = vadd.f32 %v1658, %v1698
    %v1700 = vpop.f32.mrf.mxu0
    %v1701 = vpop.f32.mrf.mxu0
    %1702 = vdwg.mxu0
    %1703 = vmatprep.subr.bf16.mxu0 %v1168
    %1704 = vmatpush1.bf16.msra.mxu0 %v1167
    %1705 = vmatprep.subr.bf16.mxu0 %v1164
    %1706 = vmatpush1.bf16.msra.mxu0 %v1163
    %1707 = vmatprep.subr.bf16.mxu0 %v1160
    %1708 = vmatpush1.bf16.msra.mxu0 %v1159
    %1709 = vmatprep.subr.bf16.mxu0 %v1156
    %1710 = vmatpush1.bf16.msra.mxu0 %v1155
    %1711 = vmatprep.subr.bf16.mxu0 %v1152
    %1712 = vmatpush1.bf16.msra.mxu0 %v1151
    %1713 = vmatprep.subr.bf16.mxu0 %v1148
    %1714 = vmatpush1.bf16.msra.mxu0 %v1147
    %1715 = vmatprep.subr.bf16.mxu0 %v1144
    %1716 = vmatpush1.bf16.msra.mxu0 %v1143
    %1717 = vmatprep.subr.bf16.mxu0 %v1140
    %1718 = vmatpush1.bf16.msra.mxu0 %v1139
    %1719 = vmatprep.subr.bf16.mxu0 %v1200
    %1720 = vmatpush2.bf16.msra.mxu0 %v1199
    %1721 = vmatprep.subr.bf16.mxu0 %v1196
    %1722 = vmatpush2.bf16.msra.mxu0 %v1195
    %1723 = vmatprep.subr.bf16.mxu0 %v1192
    %1724 = vmatpush2.bf16.msra.mxu0 %v1191
    %1725 = vmatprep.subr.bf16.mxu0 %v1188
    %1726 = vmatpush2.bf16.msra.mxu0 %v1187
    %1727 = vmatprep.subr.bf16.mxu0 %v1184
    %1728 = vmatpush2.bf16.msra.mxu0 %v1183
    %1729 = vmatprep.subr.bf16.mxu0 %v1180
    %1730 = vmatpush2.bf16.msra.mxu0 %v1179
    %1731 = vmatprep.subr.bf16.mxu0 %v1176
    %1732 = vmatpush2.bf16.msra.mxu0 %v1175
    %1733 = vmatprep.subr.bf16.mxu0 %v1172
    %1734 = vmatpush2.bf16.msra.mxu0 %v1171
    %1735 = vmatprep.mubr.bf16.mxu0 %v328
    %1736 = vmatmul.mubr.bf16.gmra.mxu0 %v327
    %v1737 = vpop.f32.mrf.mxu0
    %v1738 = vadd.f32 %v1697, %v1737
    %v1739 = vpop.f32.mrf.mxu0
    %v1740 = vadd.f32 %v1699, %v1739
    %v1741 = vpop.f32.mrf.mxu0
    %v1742 = vpop.f32.mrf.mxu0
    %1743 = vdwg.mxu0
    %1744 = vmatprep.subr.bf16.mxu0 %v1232
    %1745 = vmatpush1.bf16.msra.mxu0 %v1231
    %1746 = vmatprep.subr.bf16.mxu0 %v1228
    %1747 = vmatpush1.bf16.msra.mxu0 %v1227
    %1748 = vmatprep.subr.bf16.mxu0 %v1224
    %1749 = vmatpush1.bf16.msra.mxu0 %v1223
    %1750 = vmatprep.subr.bf16.mxu0 %v1220
    %1751 = vmatpush1.bf16.msra.mxu0 %v1219
    %1752 = vmatprep.subr.bf16.mxu0 %v1216
    %1753 = vmatpush1.bf16.msra.mxu0 %v1215
    %1754 = vmatprep.subr.bf16.mxu0 %v1212
    %1755 = vmatpush1.bf16.msra.mxu0 %v1211
    %1756 = vmatprep.subr.bf16.mxu0 %v1208
    %1757 = vmatpush1.bf16.msra.mxu0 %v1207
    %1758 = vmatprep.subr.bf16.mxu0 %v1204
    %1759 = vmatpush1.bf16.msra.mxu0 %v1203
    %1760 = vmatprep.subr.bf16.mxu0 0
    %1761 = vmatpush2.bf16.msra.mxu0 0
    %1762 = vmatprep.subr.bf16.mxu0 0
    %1763 = vmatpush2.bf16.msra.mxu0 0
    %1764 = vmatprep.subr.bf16.mxu0 0
    %1765 = vmatpush2.bf16.msra.mxu0 0
    %1766 = vmatprep.subr.bf16.mxu0 0
    %1767 = vmatpush2.bf16.msra.mxu0 0
    %1768 = vmatprep.subr.bf16.mxu0 0
    %1769 = vmatpush2.bf16.msra.mxu0 0
    %1770 = vmatprep.subr.bf16.mxu0 0
    %1771 = vmatpush2.bf16.msra.mxu0 0
    %1772 = vmatprep.subr.bf16.mxu0 0
    %1773 = vmatpush2.bf16.msra.mxu0 0
    %1774 = vmatprep.subr.bf16.mxu0 0
    %1775 = vmatpush2.bf16.msra.mxu0 0
    %1776 = vmatprep.mubr.bf16.mxu0 0
    %1777 = vmatmul.mubr.bf16.gmra.mxu0 %v329
    %v1778 = vpop.f32.mrf.mxu0
    %v1779 = vadd.f32 %v1738, %v1778
    %v1780 = vpop.f32.mrf.mxu0
    %v1781 = vadd.f32 %v1740, %v1780
    %v1782 = vpop.f32.mrf.mxu0
    %v1783 = vpop.f32.mrf.mxu0
    %1784 = vdwg.mxu0
    %v1785 = vmax.f32 %v1615, 0.0
    %v1786 = vmax.f32 %v1617, 0.0
    %v1787 = vmax.f32 %v1779, 0.0
    %v1788 = vmax.f32 %v1781, 0.0
    %v1789 = vpack.c.bf16 %v1785, %v1785
    %v1790 = vpack.c.bf16 %v1786, %v1786
    %v1791 = vpack.c.bf16 %v1787, %v1787
    %v1792 = vpack.c.bf16 %v1788, %v1788
    %v1793 = vld [vmem:[#allocation5] sm:$0xff]
    %v1794 = vld [vmem:[#allocation5 + $0x8] sm:$0xff]
    %v1795 = vld [vmem:[#allocation5 + $0x10] sm:$0xff]
    %v1796 = vld [vmem:[#allocation5 + $0x18] sm:$0xff]
    %v1797 = vld [vmem:[#allocation5 + $0x20] sm:$0xff]
    %v1798 = vld [vmem:[#allocation5 + $0x28] sm:$0xff]
    %v1799 = vld [vmem:[#allocation5 + $0x30] sm:$0xff]
    %v1800 = vld [vmem:[#allocation5 + $0x38] sm:$0xff]
    %v1801 = vld [vmem:[#allocation5 + $0x40] sm:$0xff]
    %v1802 = vld [vmem:[#allocation5 + $0x48] sm:$0xff]
    %v1803 = vld [vmem:[#allocation5 + $0x50] sm:$0xff]
    %v1804 = vld [vmem:[#allocation5 + $0x58] sm:$0xff]
    %v1805 = vld [vmem:[#allocation5 + $0x60] sm:$0xff]
    %v1806 = vld [vmem:[#allocation5 + $0x68] sm:$0xff]
    %v1807 = vld [vmem:[#allocation5 + $0x70] sm:$0xff]
    %v1808 = vld [vmem:[#allocation5 + $0x78] sm:$0xff]
    %v1809 = vld [vmem:[#allocation5 + $0x80] sm:$0xff]
    %v1810 = vld [vmem:[#allocation5 + $0x88] sm:$0xff]
    %v1811 = vld [vmem:[#allocation5 + $0x90] sm:$0xff]
    %v1812 = vld [vmem:[#allocation5 + $0x98] sm:$0xff]
    %v1813 = vld [vmem:[#allocation5 + $0xa0] sm:$0xff]
    %v1814 = vld [vmem:[#allocation5 + $0xa8] sm:$0xff]
    %v1815 = vld [vmem:[#allocation5 + $0xb0] sm:$0xff]
    %v1816 = vld [vmem:[#allocation5 + $0xb8] sm:$0xff]
    %v1817 = vld [vmem:[#allocation5 + $0xc0] sm:$0xff]
    %v1818 = vld [vmem:[#allocation5 + $0xc8] sm:$0xff]
    %v1819 = vld [vmem:[#allocation5 + $0xd0] sm:$0xff]
    %v1820 = vld [vmem:[#allocation5 + $0xd8] sm:$0xff]
    %v1821 = vld [vmem:[#allocation5 + $0xe0] sm:$0xff]
    %v1822 = vld [vmem:[#allocation5 + $0xe8] sm:$0xff]
    %v1823 = vld [vmem:[#allocation5 + $0xf0] sm:$0xff]
    %v1824 = vld [vmem:[#allocation5 + $0xf8] sm:$0xff]
    %v1825 = vld [vmem:[#allocation5 + $0x100] sm:$0xff]
    %v1826 = vld [vmem:[#allocation5 + $0x108] sm:$0xff]
    %v1827 = vld [vmem:[#allocation5 + $0x110] sm:$0xff]
    %v1828 = vld [vmem:[#allocation5 + $0x118] sm:$0xff]
    %v1829 = vld [vmem:[#allocation5 + $0x120] sm:$0xff]
    %v1830 = vld [vmem:[#allocation5 + $0x128] sm:$0xff]
    %v1831 = vld [vmem:[#allocation5 + $0x130] sm:$0xff]
    %v1832 = vld [vmem:[#allocation5 + $0x138] sm:$0xff]
    %v1833 = vld [vmem:[#allocation5 + $0x140] sm:$0xff]
    %v1834 = vld [vmem:[#allocation5 + $0x148] sm:$0xff]
    %v1835 = vld [vmem:[#allocation5 + $0x150] sm:$0xff]
    %v1836 = vld [vmem:[#allocation5 + $0x158] sm:$0xff]
    %v1837 = vld [vmem:[#allocation5 + $0x160] sm:$0xff]
    %v1838 = vld [vmem:[#allocation5 + $0x168] sm:$0xff]
    %v1839 = vld [vmem:[#allocation5 + $0x170] sm:$0xff]
    %v1840 = vld [vmem:[#allocation5 + $0x178] sm:$0xff]
    %v1841 = vld [vmem:[#allocation5 + $0x180] sm:$0xff]
    %v1842 = vld [vmem:[#allocation5 + $0x188] sm:$0xff]
    %v1843 = vld [vmem:[#allocation5 + $0x190] sm:$0xff]
    %v1844 = vld [vmem:[#allocation5 + $0x198] sm:$0xff]
    %v1845 = vld [vmem:[#allocation5 + $0x1a0] sm:$0xff]
    %v1846 = vld [vmem:[#allocation5 + $0x1a8] sm:$0xff]
    %v1847 = vld [vmem:[#allocation5 + $0x1b0] sm:$0xff]
    %v1848 = vld [vmem:[#allocation5 + $0x1b8] sm:$0xff]
    %v1849 = vld [vmem:[#allocation5 + $0x1c0] sm:$0xff]
    %v1850 = vld [vmem:[#allocation5 + $0x1c8] sm:$0xff]
    %v1851 = vld [vmem:[#allocation5 + $0x1d0] sm:$0xff]
    %v1852 = vld [vmem:[#allocation5 + $0x1d8] sm:$0xff]
    %v1853 = vld [vmem:[#allocation5 + $0x1e0] sm:$0xff]
    %v1854 = vld [vmem:[#allocation5 + $0x1e8] sm:$0xff]
    %v1855 = vld [vmem:[#allocation5 + $0x1f0] sm:$0xff]
    %v1856 = vld [vmem:[#allocation5 + $0x1f8] sm:$0xff]
    %v1857 = vld [vmem:[%s4] sm:$0x3]
    %v1859 = vlaneseq
    %v1860 = vshrl.u32 %v1859, 7
    %v1861 = vsub.s32 0, %v1860
    %v1862 = vrot.slane %v1857, %v1861
    %v1863 = vlaneseq
    %v1864 = vshrl.u32 %v1863, 7
    %v1865 = vsub.s32 1, %v1864
    %v1866 = vrot.slane %v1857, %v1865
    %v1933 = vunpack.c.l.b16 %v1793
    %v1934 = vunpack.c.h.b16 %v1793
    %v1935 = vunpack.c.l.b16 %v1794
    %v1936 = vunpack.c.h.b16 %v1794
    %v1937 = vunpack.c.l.b16 %v1795
    %v1938 = vunpack.c.h.b16 %v1795
    %v1939 = vunpack.c.l.b16 %v1796
    %v1940 = vunpack.c.h.b16 %v1796
    %v1941 = vunpack.c.l.b16 %v1797
    %v1942 = vunpack.c.h.b16 %v1797
    %v1943 = vunpack.c.l.b16 %v1798
    %v1944 = vunpack.c.h.b16 %v1798
    %v1945 = vunpack.c.l.b16 %v1799
    %v1946 = vunpack.c.h.b16 %v1799
    %v1947 = vunpack.c.l.b16 %v1800
    %v1948 = vunpack.c.h.b16 %v1800
    %v1949 = vunpack.c.l.b16 %v1801
    %v1950 = vunpack.c.h.b16 %v1801
    %v1951 = vunpack.c.l.b16 %v1802
    %v1952 = vunpack.c.h.b16 %v1802
    %v1953 = vunpack.c.l.b16 %v1803
    %v1954 = vunpack.c.h.b16 %v1803
    %v1955 = vunpack.c.l.b16 %v1804
    %v1956 = vunpack.c.h.b16 %v1804
    %v1957 = vunpack.c.l.b16 %v1805
    %v1958 = vunpack.c.h.b16 %v1805
    %v1959 = vunpack.c.l.b16 %v1806
    %v1960 = vunpack.c.h.b16 %v1806
    %v1961 = vunpack.c.l.b16 %v1807
    %v1962 = vunpack.c.h.b16 %v1807
    %v1963 = vunpack.c.l.b16 %v1808
    %v1964 = vunpack.c.h.b16 %v1808
    %v1965 = vunpack.c.l.b16 %v1809
    %v1966 = vunpack.c.h.b16 %v1809
    %v1967 = vunpack.c.l.b16 %v1810
    %v1968 = vunpack.c.h.b16 %v1810
    %v1969 = vunpack.c.l.b16 %v1811
    %v1970 = vunpack.c.h.b16 %v1811
    %v1971 = vunpack.c.l.b16 %v1812
    %v1972 = vunpack.c.h.b16 %v1812
    %v1973 = vunpack.c.l.b16 %v1813
    %v1974 = vunpack.c.h.b16 %v1813
    %v1975 = vunpack.c.l.b16 %v1814
    %v1976 = vunpack.c.h.b16 %v1814
    %v1977 = vunpack.c.l.b16 %v1815
    %v1978 = vunpack.c.h.b16 %v1815
    %v1979 = vunpack.c.l.b16 %v1816
    %v1980 = vunpack.c.h.b16 %v1816
    %v1981 = vunpack.c.l.b16 %v1817
    %v1982 = vunpack.c.h.b16 %v1817
    %v1983 = vunpack.c.l.b16 %v1818
    %v1984 = vunpack.c.h.b16 %v1818
    %v1985 = vunpack.c.l.b16 %v1819
    %v1986 = vunpack.c.h.b16 %v1819
    %v1987 = vunpack.c.l.b16 %v1820
    %v1988 = vunpack.c.h.b16 %v1820
    %v1989 = vunpack.c.l.b16 %v1821
    %v1990 = vunpack.c.h.b16 %v1821
    %v1991 = vunpack.c.l.b16 %v1822
    %v1992 = vunpack.c.h.b16 %v1822
    %v1993 = vunpack.c.l.b16 %v1823
    %v1994 = vunpack.c.h.b16 %v1823
    %v1995 = vunpack.c.l.b16 %v1824
    %v1996 = vunpack.c.h.b16 %v1824
    %v1997 = vunpack.c.l.b16 %v1825
    %v1998 = vunpack.c.h.b16 %v1825
    %v1999 = vunpack.c.l.b16 %v1826
    %v2000 = vunpack.c.h.b16 %v1826
    %v2001 = vunpack.c.l.b16 %v1827
    %v2002 = vunpack.c.h.b16 %v1827
    %v2003 = vunpack.c.l.b16 %v1828
    %v2004 = vunpack.c.h.b16 %v1828
    %v2005 = vunpack.c.l.b16 %v1829
    %v2006 = vunpack.c.h.b16 %v1829
    %v2007 = vunpack.c.l.b16 %v1830
    %v2008 = vunpack.c.h.b16 %v1830
    %v2009 = vunpack.c.l.b16 %v1831
    %v2010 = vunpack.c.h.b16 %v1831
    %v2011 = vunpack.c.l.b16 %v1832
    %v2012 = vunpack.c.h.b16 %v1832
    %v2013 = vunpack.c.l.b16 %v1833
    %v2014 = vunpack.c.h.b16 %v1833
    %v2015 = vunpack.c.l.b16 %v1834
    %v2016 = vunpack.c.h.b16 %v1834
    %v2017 = vunpack.c.l.b16 %v1835
    %v2018 = vunpack.c.h.b16 %v1835
    %v2019 = vunpack.c.l.b16 %v1836
    %v2020 = vunpack.c.h.b16 %v1836
    %v2021 = vunpack.c.l.b16 %v1837
    %v2022 = vunpack.c.h.b16 %v1837
    %v2023 = vunpack.c.l.b16 %v1838
    %v2024 = vunpack.c.h.b16 %v1838
    %v2025 = vunpack.c.l.b16 %v1839
    %v2026 = vunpack.c.h.b16 %v1839
    %v2027 = vunpack.c.l.b16 %v1840
    %v2028 = vunpack.c.h.b16 %v1840
    %v2029 = vunpack.c.l.b16 %v1841
    %v2030 = vunpack.c.h.b16 %v1841
    %v2031 = vunpack.c.l.b16 %v1842
    %v2032 = vunpack.c.h.b16 %v1842
    %v2033 = vunpack.c.l.b16 %v1843
    %v2034 = vunpack.c.h.b16 %v1843
    %v2035 = vunpack.c.l.b16 %v1844
    %v2036 = vunpack.c.h.b16 %v1844
    %v2037 = vunpack.c.l.b16 %v1845
    %v2038 = vunpack.c.h.b16 %v1845
    %v2039 = vunpack.c.l.b16 %v1846
    %v2040 = vunpack.c.h.b16 %v1846
    %v2041 = vunpack.c.l.b16 %v1847
    %v2042 = vunpack.c.h.b16 %v1847
    %v2043 = vunpack.c.l.b16 %v1848
    %v2044 = vunpack.c.h.b16 %v1848
    %v2045 = vunpack.c.l.b16 %v1849
    %v2046 = vunpack.c.h.b16 %v1849
    %v2047 = vunpack.c.l.b16 %v1850
    %v2048 = vunpack.c.h.b16 %v1850
    %v2049 = vunpack.c.l.b16 %v1851
    %v2050 = vunpack.c.h.b16 %v1851
    %v2051 = vunpack.c.l.b16 %v1852
    %v2052 = vunpack.c.h.b16 %v1852
    %v2053 = vunpack.c.l.b16 %v1853
    %v2054 = vunpack.c.h.b16 %v1853
    %v2055 = vunpack.c.l.b16 %v1854
    %v2056 = vunpack.c.h.b16 %v1854
    %v2057 = vunpack.c.l.b16 %v1855
    %v2058 = vunpack.c.h.b16 %v1855
    %v2059 = vunpack.c.l.b16 %v1856
    %v2060 = vunpack.c.h.b16 %v1856
    %v2061 = vpack.c.b16 %v1935, %v1933
    %v2062 = vpack.c.b16 %v1936, %v1934
    %v2063 = vpack.c.b16 %v1939, %v1937
    %v2064 = vpack.c.b16 %v1940, %v1938
    %v2065 = vpack.c.b16 %v1943, %v1941
    %v2066 = vpack.c.b16 %v1944, %v1942
    %v2067 = vpack.c.b16 %v1947, %v1945
    %v2068 = vpack.c.b16 %v1948, %v1946
    %v2069 = vpack.c.b16 %v1951, %v1949
    %v2070 = vpack.c.b16 %v1952, %v1950
    %v2071 = vpack.c.b16 %v1955, %v1953
    %v2072 = vpack.c.b16 %v1956, %v1954
    %v2073 = vpack.c.b16 %v1959, %v1957
    %v2074 = vpack.c.b16 %v1960, %v1958
    %v2075 = vpack.c.b16 %v1963, %v1961
    %v2076 = vpack.c.b16 %v1964, %v1962
    %v2077 = vpack.c.b16 %v1967, %v1965
    %v2078 = vpack.c.b16 %v1968, %v1966
    %v2079 = vpack.c.b16 %v1971, %v1969
    %v2080 = vpack.c.b16 %v1972, %v1970
    %v2081 = vpack.c.b16 %v1975, %v1973
    %v2082 = vpack.c.b16 %v1976, %v1974
    %v2083 = vpack.c.b16 %v1979, %v1977
    %v2084 = vpack.c.b16 %v1980, %v1978
    %v2085 = vpack.c.b16 %v1983, %v1981
    %v2086 = vpack.c.b16 %v1984, %v1982
    %v2087 = vpack.c.b16 %v1987, %v1985
    %v2088 = vpack.c.b16 %v1988, %v1986
    %v2089 = vpack.c.b16 %v1991, %v1989
    %v2090 = vpack.c.b16 %v1992, %v1990
    %v2091 = vpack.c.b16 %v1995, %v1993
    %v2092 = vpack.c.b16 %v1996, %v1994
    %v2093 = vpack.c.b16 %v1999, %v1997
    %v2094 = vpack.c.b16 %v2000, %v1998
    %v2095 = vpack.c.b16 %v2003, %v2001
    %v2096 = vpack.c.b16 %v2004, %v2002
    %v2097 = vpack.c.b16 %v2007, %v2005
    %v2098 = vpack.c.b16 %v2008, %v2006
    %v2099 = vpack.c.b16 %v2011, %v2009
    %v2100 = vpack.c.b16 %v2012, %v2010
    %v2101 = vpack.c.b16 %v2015, %v2013
    %v2102 = vpack.c.b16 %v2016, %v2014
    %v2103 = vpack.c.b16 %v2019, %v2017
    %v2104 = vpack.c.b16 %v2020, %v2018
    %v2105 = vpack.c.b16 %v2023, %v2021
    %v2106 = vpack.c.b16 %v2024, %v2022
    %v2107 = vpack.c.b16 %v2027, %v2025
    %v2108 = vpack.c.b16 %v2028, %v2026
    %v2109 = vpack.c.b16 %v2031, %v2029
    %v2110 = vpack.c.b16 %v2032, %v2030
    %v2111 = vpack.c.b16 %v2035, %v2033
    %v2112 = vpack.c.b16 %v2036, %v2034
    %v2113 = vpack.c.b16 %v2039, %v2037
    %v2114 = vpack.c.b16 %v2040, %v2038
    %v2115 = vpack.c.b16 %v2043, %v2041
    %v2116 = vpack.c.b16 %v2044, %v2042
    %v2117 = vpack.c.b16 %v2047, %v2045
    %v2118 = vpack.c.b16 %v2048, %v2046
    %v2119 = vpack.c.b16 %v2051, %v2049
    %v2120 = vpack.c.b16 %v2052, %v2050
    %v2121 = vpack.c.b16 %v2055, %v2053
    %v2122 = vpack.c.b16 %v2056, %v2054
    %v2123 = vpack.c.b16 %v2059, %v2057
    %v2124 = vpack.c.b16 %v2060, %v2058
    %2189 = vmatprep.subr.bf16.mxu0 %v2076
    %2190 = vmatpush1.bf16.msra.mxu0 %v2075
    %2191 = vmatprep.subr.bf16.mxu0 %v2074
    %2192 = vmatpush1.bf16.msra.mxu0 %v2073
    %2193 = vmatprep.subr.bf16.mxu0 %v2072
    %2194 = vmatpush1.bf16.msra.mxu0 %v2071
    %2195 = vmatprep.subr.bf16.mxu0 %v2070
    %2196 = vmatpush1.bf16.msra.mxu0 %v2069
    %2197 = vmatprep.subr.bf16.mxu0 %v2068
    %2198 = vmatpush1.bf16.msra.mxu0 %v2067
    %2199 = vmatprep.subr.bf16.mxu0 %v2066
    %2200 = vmatpush1.bf16.msra.mxu0 %v2065
    %2201 = vmatprep.subr.bf16.mxu0 %v2064
    %2202 = vmatpush1.bf16.msra.mxu0 %v2063
    %2203 = vmatprep.subr.bf16.mxu0 %v2062
    %2204 = vmatpush1.bf16.msra.mxu0 %v2061
    %2205 = vmatprep.subr.bf16.mxu0 %v2092
    %2206 = vmatpush2.bf16.msra.mxu0 %v2091
    %2207 = vmatprep.subr.bf16.mxu0 %v2090
    %2208 = vmatpush2.bf16.msra.mxu0 %v2089
    %2209 = vmatprep.subr.bf16.mxu0 %v2088
    %2210 = vmatpush2.bf16.msra.mxu0 %v2087
    %2211 = vmatprep.subr.bf16.mxu0 %v2086
    %2212 = vmatpush2.bf16.msra.mxu0 %v2085
    %2213 = vmatprep.subr.bf16.mxu0 %v2084
    %2214 = vmatpush2.bf16.msra.mxu0 %v2083
    %2215 = vmatprep.subr.bf16.mxu0 %v2082
    %2216 = vmatpush2.bf16.msra.mxu0 %v2081
    %2217 = vmatprep.subr.bf16.mxu0 %v2080
    %2218 = vmatpush2.bf16.msra.mxu0 %v2079
    %2219 = vmatprep.subr.bf16.mxu0 %v2078
    %2220 = vmatpush2.bf16.msra.mxu0 %v2077
    %2221 = vmatprep.mubr.bf16.mxu0 %v1790
    %2222 = vmatmul.mubr.bf16.gmra.mxu0 %v1789
    %v2223 = vpop.f32.mrf.mxu0
    %v2224 = vadd.f32 %v1862, %v2223
    %v2225 = vpop.f32.mrf.mxu0
    %v2226 = vadd.f32 %v1866, %v2225
    %v2227 = vpop.f32.mrf.mxu0
    %v2228 = vpop.f32.mrf.mxu0
    %2229 = vdwg.mxu0
    %2230 = vmatprep.subr.bf16.mxu0 %v2108
    %2231 = vmatpush1.bf16.msra.mxu0 %v2107
    %2232 = vmatprep.subr.bf16.mxu0 %v2106
    %2233 = vmatpush1.bf16.msra.mxu0 %v2105
    %2234 = vmatprep.subr.bf16.mxu0 %v2104
    %2235 = vmatpush1.bf16.msra.mxu0 %v2103
    %2236 = vmatprep.subr.bf16.mxu0 %v2102
    %2237 = vmatpush1.bf16.msra.mxu0 %v2101
    %2238 = vmatprep.subr.bf16.mxu0 %v2100
    %2239 = vmatpush1.bf16.msra.mxu0 %v2099
    %2240 = vmatprep.subr.bf16.mxu0 %v2098
    %2241 = vmatpush1.bf16.msra.mxu0 %v2097
    %2242 = vmatprep.subr.bf16.mxu0 %v2096
    %2243 = vmatpush1.bf16.msra.mxu0 %v2095
    %2244 = vmatprep.subr.bf16.mxu0 %v2094
    %2245 = vmatpush1.bf16.msra.mxu0 %v2093
    %2246 = vmatprep.subr.bf16.mxu0 %v2124
    %2247 = vmatpush2.bf16.msra.mxu0 %v2123
    %2248 = vmatprep.subr.bf16.mxu0 %v2122
    %2249 = vmatpush2.bf16.msra.mxu0 %v2121
    %2250 = vmatprep.subr.bf16.mxu0 %v2120
    %2251 = vmatpush2.bf16.msra.mxu0 %v2119
    %2252 = vmatprep.subr.bf16.mxu0 %v2118
    %2253 = vmatpush2.bf16.msra.mxu0 %v2117
    %2254 = vmatprep.subr.bf16.mxu0 %v2116
    %2255 = vmatpush2.bf16.msra.mxu0 %v2115
    %2256 = vmatprep.subr.bf16.mxu0 %v2114
    %2257 = vmatpush2.bf16.msra.mxu0 %v2113
    %2258 = vmatprep.subr.bf16.mxu0 %v2112
    %2259 = vmatpush2.bf16.msra.mxu0 %v2111
    %2260 = vmatprep.subr.bf16.mxu0 %v2110
    %2261 = vmatpush2.bf16.msra.mxu0 %v2109
    %2262 = vmatprep.mubr.bf16.mxu0 %v1792
    %2263 = vmatmul.mubr.bf16.gmra.mxu0 %v1791
    %v2264 = vpop.f32.mrf.mxu0
    %v2265 = vadd.f32 %v2224, %v2264
    %v2266 = vpop.f32.mrf.mxu0
    %v2267 = vadd.f32 %v2226, %v2266
    %v2268 = vpop.f32.mrf.mxu0
    %v2269 = vpop.f32.mrf.mxu0
    %2270 = vdwg.mxu0
    %v2271 = vmax.f32 %v2265, 0.0
    %v2272 = vmax.f32 %v2267, 0.0
    %v2273 = vpack.c.bf16 %v2271, %v2271
    %v2274 = vpack.c.bf16 %v2272, %v2272
    %v2275 = vld [vmem:[%s5] sm:$0xf]
    %v2276 = vld [vmem:[%s5 + $0x4] sm:$0xf]
    %v2277 = vld [vmem:[%s5 + $0x8] sm:$0xf]
    %v2278 = vld [vmem:[%s5 + $0xc] sm:$0xf]
    %v2279 = vld [vmem:[%s5 + $0x10] sm:$0xf]
    %v2280 = vld [vmem:[%s5 + $0x14] sm:$0xf]
    %v2281 = vld [vmem:[%s5 + $0x18] sm:$0xf]
    %v2282 = vld [vmem:[%s5 + $0x1c] sm:$0xf]
    %v2283 = vld [vmem:[%s5 + $0x20] sm:$0xf]
    %v2284 = vld [vmem:[%s5 + $0x24] sm:$0xf]
    %v2285 = vld [vmem:[%s5 + $0x28] sm:$0xf]
    %v2286 = vld [vmem:[%s5 + $0x2c] sm:$0xf]
    %v2287 = vld [vmem:[%s5 + $0x30] sm:$0xf]
    %v2288 = vld [vmem:[%s5 + $0x34] sm:$0xf]
    %v2289 = vld [vmem:[%s5 + $0x38] sm:$0xf]
    %v2290 = vld [vmem:[%s5 + $0x3c] sm:$0xf]
    %v2291 = vld [vmem:[%s5 + $0x40] sm:$0xf]
    %v2292 = vld [vmem:[%s5 + $0x44] sm:$0xf]
    %v2293 = vld [vmem:[%s5 + $0x48] sm:$0xf]
    %v2294 = vld [vmem:[%s5 + $0x4c] sm:$0xf]
    %v2295 = vld [vmem:[%s5 + $0x50] sm:$0xf]
    %v2296 = vld [vmem:[%s5 + $0x54] sm:$0xf]
    %v2297 = vld [vmem:[%s5 + $0x58] sm:$0xf]
    %v2298 = vld [vmem:[%s5 + $0x5c] sm:$0xf]
    %v2299 = vld [vmem:[%s5 + $0x60] sm:$0xf]
    %v2300 = vld [vmem:[%s5 + $0x64] sm:$0xf]
    %v2301 = vld [vmem:[%s5 + $0x68] sm:$0xf]
    %v2302 = vld [vmem:[%s5 + $0x6c] sm:$0xf]
    %v2303 = vld [vmem:[%s5 + $0x70] sm:$0xf]
    %v2304 = vld [vmem:[%s5 + $0x74] sm:$0xf]
    %v2305 = vld [vmem:[%s5 + $0x78] sm:$0xf]
    %v2306 = vld [vmem:[%s5 + $0x7c] sm:$0xf]
    %v2307 = vld [vmem:[%s6] sm:$0x1]
    %v2309 = vlaneseq
    %v2310 = vshrl.u32 %v2309, 7
    %v2311 = vsub.s32 0, %v2310
    %v2312 = vrot.slane %v2307, %v2311
    %v2346 = vunpack.c.l.b16 %v2275
    %v2347 = vunpack.c.l.b16 %v2276
    %v2348 = vunpack.c.l.b16 %v2277
    %v2349 = vunpack.c.l.b16 %v2278
    %v2350 = vunpack.c.l.b16 %v2279
    %v2351 = vunpack.c.l.b16 %v2280
    %v2352 = vunpack.c.l.b16 %v2281
    %v2353 = vunpack.c.l.b16 %v2282
    %v2354 = vunpack.c.l.b16 %v2283
    %v2355 = vunpack.c.l.b16 %v2284
    %v2356 = vunpack.c.l.b16 %v2285
    %v2357 = vunpack.c.l.b16 %v2286
    %v2358 = vunpack.c.l.b16 %v2287
    %v2359 = vunpack.c.l.b16 %v2288
    %v2360 = vunpack.c.l.b16 %v2289
    %v2361 = vunpack.c.l.b16 %v2290
    %v2362 = vunpack.c.l.b16 %v2291
    %v2363 = vunpack.c.l.b16 %v2292
    %v2364 = vunpack.c.l.b16 %v2293
    %v2365 = vunpack.c.l.b16 %v2294
    %v2366 = vunpack.c.l.b16 %v2295
    %v2367 = vunpack.c.l.b16 %v2296
    %v2368 = vunpack.c.l.b16 %v2297
    %v2369 = vunpack.c.l.b16 %v2298
    %v2370 = vunpack.c.l.b16 %v2299
    %v2371 = vunpack.c.l.b16 %v2300
    %v2372 = vunpack.c.l.b16 %v2301
    %v2373 = vunpack.c.l.b16 %v2302
    %v2374 = vunpack.c.l.b16 %v2303
    %v2375 = vunpack.c.l.b16 %v2304
    %v2376 = vunpack.c.l.b16 %v2305
    %v2377 = vunpack.c.l.b16 %v2306
    %v2378 = vpack.c.b16 %v2347, %v2346
    %v2379 = vpack.c.b16 %v2349, %v2348
    %v2380 = vpack.c.b16 %v2351, %v2350
    %v2381 = vpack.c.b16 %v2353, %v2352
    %v2382 = vpack.c.b16 %v2355, %v2354
    %v2383 = vpack.c.b16 %v2357, %v2356
    %v2384 = vpack.c.b16 %v2359, %v2358
    %v2385 = vpack.c.b16 %v2361, %v2360
    %v2386 = vpack.c.b16 %v2363, %v2362
    %v2387 = vpack.c.b16 %v2365, %v2364
    %v2388 = vpack.c.b16 %v2367, %v2366
    %v2389 = vpack.c.b16 %v2369, %v2368
    %v2390 = vpack.c.b16 %v2371, %v2370
    %v2391 = vpack.c.b16 %v2373, %v2372
    %v2392 = vpack.c.b16 %v2375, %v2374
    %v2393 = vpack.c.b16 %v2377, %v2376
    %2410 = vmatprep.subr.bf16.mxu0 0
    %2411 = vmatpush1.bf16.msra.mxu0 %v2385
    %2412 = vmatprep.subr.bf16.mxu0 0
    %2413 = vmatpush1.bf16.msra.mxu0 %v2384
    %2414 = vmatprep.subr.bf16.mxu0 0
    %2415 = vmatpush1.bf16.msra.mxu0 %v2383
    %2416 = vmatprep.subr.bf16.mxu0 0
    %2417 = vmatpush1.bf16.msra.mxu0 %v2382
    %2418 = vmatprep.subr.bf16.mxu0 0
    %2419 = vmatpush1.bf16.msra.mxu0 %v2381
    %2420 = vmatprep.subr.bf16.mxu0 0
    %2421 = vmatpush1.bf16.msra.mxu0 %v2380
    %2422 = vmatprep.subr.bf16.mxu0 0
    %2423 = vmatpush1.bf16.msra.mxu0 %v2379
    %2424 = vmatprep.subr.bf16.mxu0 0
    %2425 = vmatpush1.bf16.msra.mxu0 %v2378
    %2426 = vmatprep.subr.bf16.mxu0 0
    %2427 = vmatpush2.bf16.msra.mxu0 %v2393
    %2428 = vmatprep.subr.bf16.mxu0 0
    %2429 = vmatpush2.bf16.msra.mxu0 %v2392
    %2430 = vmatprep.subr.bf16.mxu0 0
    %2431 = vmatpush2.bf16.msra.mxu0 %v2391
    %2432 = vmatprep.subr.bf16.mxu0 0
    %2433 = vmatpush2.bf16.msra.mxu0 %v2390
    %2434 = vmatprep.subr.bf16.mxu0 0
    %2435 = vmatpush2.bf16.msra.mxu0 %v2389
    %2436 = vmatprep.subr.bf16.mxu0 0
    %2437 = vmatpush2.bf16.msra.mxu0 %v2388
    %2438 = vmatprep.subr.bf16.mxu0 0
    %2439 = vmatpush2.bf16.msra.mxu0 %v2387
    %2440 = vmatprep.subr.bf16.mxu0 0
    %2441 = vmatpush2.bf16.msra.mxu0 %v2386
    %2442 = vmatprep.mubr.bf16.mxu0 %v2274
    %2443 = vmatmul.mubr.bf16.gmra.mxu0 %v2273
    %v2444 = vpop.f32.mrf.mxu0
    %v2445 = vadd.f32 %v2312, %v2444
    %v2446 = vpop.f32.mrf.mxu0
    %v2447 = vpop.f32.mrf.mxu0
    %v2448 = vpop.f32.mrf.mxu0
    %2449 = vdwg.mxu0
    %v2450 = vmax.f32 %v2445, 0.0
    %v2451 = vpack.c.bf16 %v2450, %v2450
    %v2452 = vld [vmem:[%s7] sm:$0xf]
    %v2453 = vld [vmem:[%s7 + $0x4] sm:$0xf]
    %v2454 = vld [vmem:[%s7 + $0x8] sm:$0xf]
    %v2455 = vld [vmem:[%s7 + $0xc] sm:$0xf]
    %v2456 = vld [vmem:[%s8] sm:$0x1]
    %v2458 = vlaneseq
    %v2459 = vshrl.u32 %v2458, 7
    %v2460 = vsub.s32 0, %v2459
    %v2461 = vrot.slane %v2456, %v2460
    %v2467 = vunpack.c.l.b16 %v2452
    %v2468 = vunpack.c.l.b16 %v2453
    %v2469 = vunpack.c.l.b16 %v2454
    %v2470 = vunpack.c.l.b16 %v2455
    %v2471 = vpack.c.b16 %v2468, %v2467
    %v2472 = vpack.c.b16 %v2470, %v2469
    %vm2475 = vcmask 261120
    %v2477 = vsel %vm2475, %v2451, 0
    %2479 = vmatprep.subr.bf16.mxu0 0
    %2480 = vmatpush1.bf16.msra.mxu0 0
    %2481 = vmatprep.subr.bf16.mxu0 0
    %2482 = vmatpush1.bf16.msra.mxu0 0
    %2483 = vmatprep.subr.bf16.mxu0 0
    %2484 = vmatpush1.bf16.msra.mxu0 0
    %2485 = vmatprep.subr.bf16.mxu0 0
    %2486 = vmatpush1.bf16.msra.mxu0 0
    %2487 = vmatprep.subr.bf16.mxu0 0
    %2488 = vmatpush1.bf16.msra.mxu0 0
    %2489 = vmatprep.subr.bf16.mxu0 0
    %2490 = vmatpush1.bf16.msra.mxu0 0
    %2491 = vmatprep.subr.bf16.mxu0 0
    %2492 = vmatpush1.bf16.msra.mxu0 %v2472
    %2493 = vmatprep.subr.bf16.mxu0 0
    %2494 = vmatpush1.bf16.msra.mxu0 %v2471
    %2495 = vmatprep.subr.bf16.mxu0 0
    %2496 = vmatpush2.bf16.msra.mxu0 0
    %2497 = vmatprep.subr.bf16.mxu0 0
    %2498 = vmatpush2.bf16.msra.mxu0 0
    %2499 = vmatprep.subr.bf16.mxu0 0
    %2500 = vmatpush2.bf16.msra.mxu0 0
    %2501 = vmatprep.subr.bf16.mxu0 0
    %2502 = vmatpush2.bf16.msra.mxu0 0
    %2503 = vmatprep.subr.bf16.mxu0 0
    %2504 = vmatpush2.bf16.msra.mxu0 0
    %2505 = vmatprep.subr.bf16.mxu0 0
    %2506 = vmatpush2.bf16.msra.mxu0 0
    %2507 = vmatprep.subr.bf16.mxu0 0
    %2508 = vmatpush2.bf16.msra.mxu0 0
    %2509 = vmatprep.subr.bf16.mxu0 0
    %2510 = vmatpush2.bf16.msra.mxu0 0
    %2511 = vmatprep.mubr.bf16.mxu0 0
    %2512 = vmatmul.mubr.bf16.gmra.mxu0 %v2477
    %v2513 = vpop.f32.mrf.mxu0
    %v2514 = vadd.f32 %v2461, %v2513
    %v2515 = vpop.f32.mrf.mxu0
    %v2516 = vpop.f32.mrf.mxu0
    %v2517 = vpop.f32.mrf.mxu0
    %2518 = vdwg.mxu0
    %vm2519 = vcmask 64512
    %v2520 = vsel %vm2519, %v2514, -inf
    %2521 = vmax.xlane.f32.xlu0 %v2520
    %v2522 = vpop.xlane.xlu0 %2521
    %v2523 = vsub.f32 %v2514, %v2522
    %v2524 = vmul.f32 %v2523, 1.442695
    %v2525 = vpow.pop %v2524
    %v2526 = vsel %vm2519, %v2525, 0.0
    %2527 = vadd.xlane.f32.xlu0 %v2526
    %v2528 = vpop.xlane.xlu0 %2527
    %v2529 = vrcp.pop %v2528
    %v2530 = vmul.f32 %v2525, %v2529
    %2531 = vst.msk [vmem:[#allocation7] sm:$0xff] %vm2519, %v2530
    // Predicated region
    $region46: #{tpu_custom_call.1} parent=1 // pred_check
      _
    $region47: #{tpu_custom_call.1} parent=1 // pred_check_branch
      %2533 = sbr.rel (0) target = $region49
    $region48: #{tpu_custom_call.1} parent=1 // pred_region
      %s2535 = ssub.s32 128, 128
      %2536 = vsyncadd [#allocation4], %s2535
      %s2538 = sshll.u32 [#allocation7], 4
      %s2539 = int_to_ptr.vmem [resolvable:$true] %s2538
      %2541 = dma.vmem_to_hbm [thread:$0]  %s2539, 128, %s9, [#allocation4]
    $region49: #{tpu_custom_call.1} parent=1 // pred_fallthru
      _
    // Predicated region
    $region50: #{tpu_custom_call.1} parent=1 // pred_check
      _
    $region51: #{tpu_custom_call.1} parent=1 // pred_check_branch
      %2543 = sbr.rel (0) target = $region53
    $region52: #{tpu_custom_call.1} parent=1 // pred_region
      %2544 = dma.done [#allocation4], 128
    $region53: #{tpu_custom_call.1} parent=1 // pred_fallthru
      _
    %2545 = vsyncpa [#allocation3], 1
    %2546 = vsyncpa [#allocation6], 1
    %2547 = vsyncpa [#allocation4], 1

</llo_original>
